<compile_context>
chip_gen: v7x
topology: tpu7x:2x2x1
jax: 0.10.0
libtpu: 0.0.40
codegen_flags: <defaults>
</compile_context>

<pallas_src>
import functools

import jax
import jax.numpy as jnp
from jax import lax
from jax.experimental import pallas as pl
from jax.experimental.pallas import tpu as pltpu

_HI = jax.lax.Precision.HIGHEST


# --------------------------------------------------------------------------
# Kernel 1: CNN(zigzag_PI) -> (B, dim_out/2)
# TODO(synk): the CNN submodule definition is not included in the reference
# source; a representative conv3x3(pad=1) -> ReLU -> global-avg-pool -> linear
# head with int(dim_out/2) outputs is used instead.
# --------------------------------------------------------------------------
def _cnn_kernel(p_ref, w_ref, cb_ref, pool_ref, fcw_ref, fcb_ref, o_ref):
    # p_ref: (9, B*H*W) lane-dense patches; w_ref: (C, 9); cb_ref: (C, 1)
    # pool_ref: (B, B*H*W) mean-pool matrix; fcw_ref: (C, O2); fcb_ref: (1, O2)
    conv = jnp.dot(w_ref[...], p_ref[...],
                   preferred_element_type=jnp.float32, precision=_HI)  # (C, B*HW)
    conv = jnp.maximum(conv + cb_ref[...], 0.0)                        # bias + ReLU
    # global average pool over H*W for every batch, as one matmul -> (B, C)
    feat = lax.dot_general(pool_ref[...], conv, (((1,), (1,)), ((), ())),
                           preferred_element_type=jnp.float32, precision=_HI)
    o_ref[...] = jnp.dot(feat, fcw_ref[...],
                         preferred_element_type=jnp.float32,
                         precision=_HI) + fcb_ref[...]                 # (B, O2)


def cnn_forward(zigzag_PI, conv_w, conv_b, fc_w, fc_b):
    B, _, H, W = zigzag_PI.shape
    C = conv_w.shape[0]
    o2 = fc_w.shape[1]
    hw = H * W
    padded = jnp.pad(zigzag_PI, ((0, 0), (0, 0), (1, 1), (1, 1)))
    # im2col glue (outside kernel); keep the size-9 axis OFF the lane axis.
    cols = [padded[:, 0, kh:kh + H, kw:kw + W].reshape(B, hw)
            for kh in range(3) for kw in range(3)]
    patches_T = jnp.stack(cols, axis=0).reshape(9, B * hw)             # (9, B*HW)
    w_flat = conv_w.reshape(C, 9)                                      # (C, 9)
    pool = jnp.repeat(jnp.eye(B, dtype=jnp.float32), hw, axis=1) / float(hw)
    return pl.pallas_call(
        _cnn_kernel,
        out_shape=jax.ShapeDtypeStruct((B, o2), jnp.float32),
    )(patches_T, w_flat, conv_b.reshape(C, 1), pool, fc_w, fc_b.reshape(1, o2))


# --------------------------------------------------------------------------
# Kernel 2: fused supports + graph-conv + window-conv + topo scaling + bias
# Single grid-less invocation; the (small) batch is handled by an unrolled
# in-kernel loop (per-grid-step overhead would dominate at these sizes).
# --------------------------------------------------------------------------
def _main_kernel(link_len, window_len, embed_dim,
                 x_ref, xw_ref, e_ref, wp_ref, wwp_ref, bp_ref, topo_ref,
                 t_ref, out_ref):
    e = e_ref[...]                                                     # (N, D)
    n_batch = x_ref.shape[0]
    n_node = x_ref.shape[1]
    ci = x_ref.shape[2]
    iw = xw_ref.shape[3]

    # ---- supports: softmax(relu(E E^T), dim=1); only S^1..S^{K-1} are built,
    #      the k=0 identity term is applied implicitly below.
    a = lax.dot_general(e, e, (((1,), (1,)), ((), ())),
                        preferred_element_type=jnp.float32, precision=_HI)
    a = jnp.maximum(a, 0.0)
    a = a - jnp.max(a, axis=1, keepdims=True)                          # stable softmax
    p = jnp.exp(a)
    s = p / jnp.sum(p, axis=1, keepdims=True)
    s_pows = [s]
    for _ in range(2, link_len):
        s_pows.append(jnp.dot(s, s_pows[-1],
                              preferred_element_type=jnp.float32, precision=_HI))

    wp = wp_ref[...]                                                   # (D*K*Ci, O2)
    wwp = wwp_ref[...]                                                 # (D*K*Iw, O2)
    bias = jnp.dot(e, bp_ref[...],
                   preferred_element_type=jnp.float32, precision=_HI)  # (N, dim_out)
    topo_all = topo_ref[...]                                           # (B, O2)

    # ---- hoist the T-sum ahead of the support matmuls (exact: linear in x_window)
    x_list = [x_ref[b] for b in range(n_batch)]                        # (N, Ci) each
    xw_sums = []
    for b in range(n_batch):
        acc = t_ref[0] * xw_ref[b, 0]
        for t in range(1, window_len):
            acc = acc + t_ref[t] * xw_ref[b, t]
        xw_sums.append(acc)                                            # (N, Iw)

    # ---- support matmuls shared by ALL batches and both branches via
    #      lane-packing: K-1 matmuls total (k=0 is the implicit identity).
    stride = ci + iw
    xc_all = jnp.concatenate(
        [jnp.concatenate([x_list[b], xw_sums[b]], axis=-1) for b in range(n_batch)],
        axis=-1)                                                       # (N, B*(Ci+Iw))
    r_list = [jnp.dot(s_k, xc_all, preferred_element_type=jnp.float32,
                      precision=_HI) for s_k in s_pows]

    # ---- fuse the embed-dim contraction into a single matmul per branch:
    #      z[n, d*K*Ci + j] = E[n, d] * x_flat[n, j]  (matches W.reshape row order)
    zg_rows, zw_rows = [], []
    for b in range(n_batch):                                           # unrolled, small B
        off = b * stride
        g_parts = [x_list[b]]
        w_parts = [xw_sums[b]]
        for r in r_list:
            g_parts.append(r[:, off:off + ci])
            w_parts.append(r[:, off + ci:off + stride])
        xg_flat = jnp.concatenate(g_parts, axis=-1)                    # (N, K*Ci)
        xw_flat = jnp.concatenate(w_parts, axis=-1)                    # (N, K*Iw)
        zg_rows.append(jnp.concatenate(
            [e[:, d:d + 1] * xg_flat for d in range(embed_dim)], axis=-1))
        zw_rows.append(jnp.concatenate(
            [e[:, d:d + 1] * xw_flat for d in range(embed_dim)], axis=-1))

    zg_all = jnp.concatenate(zg_rows, axis=0)                          # (B*N, D*K*Ci)
    zw_all = jnp.concatenate(zw_rows, axis=0)                          # (B*N, D*K*Iw)
    g_all = jnp.dot(zg_all, wp, preferred_element_type=jnp.float32, precision=_HI)
    w_all = jnp.dot(zw_all, wwp, preferred_element_type=jnp.float32, precision=_HI)

    # ---- topo scaling, concat, bias
    for b in range(n_batch):
        topo_b = topo_all[b:b + 1, :]                                  # (1, O2)
        g_b = g_all[b * n_node:(b + 1) * n_node, :]                    # (N, O2)
        w_b = w_all[b * n_node:(b + 1) * n_node, :]                    # (N, O2)
        out_b = jnp.concatenate([g_b * topo_b, w_b * topo_b],
                                axis=-1) + bias                        # (N, dim_out)
        out_ref[b] = out_b.astype(out_ref.dtype)


def tlsgcn_forward(x, x_window, node_embeddings, zigzag_PI, params):
    weights_pool = params["weights_pool"]        # (D, K, dim_in, O2)
    weights_window = params["weights_window"]    # (D, K, dim_in_w, O2)
    bias_pool = params["bias_pool"]              # (D, dim_out)
    T_vec = params["T"]                          # (window_len,)

    B, N, Ci = x.shape
    _, Tw, _, Iw = x_window.shape
    D, K, _, O2 = weights_pool.shape
    dim_out = bias_pool.shape[1]

    topo = cnn_forward(zigzag_PI, params["conv_w"], params["conv_b"],
                       params["fc_w"], params["fc_b"])                 # (B, O2)

    # glue reshapes of parameters (row order d*K*Ci + k*Ci + i matches zg/zw)
    wp_flat = weights_pool.reshape(D * K * Ci, O2)
    wwp_flat = weights_window.reshape(D * K * Iw, O2)

    kernel = functools.partial(_main_kernel, K, Tw, D)
    return pl.pallas_call(
        kernel,
        out_shape=jax.ShapeDtypeStruct((B, N, dim_out), jnp.float32),
        in_specs=[
            pl.BlockSpec(memory_space=pltpu.MemorySpace.VMEM),         # x
            pl.BlockSpec(memory_space=pltpu.MemorySpace.VMEM),         # x_window
            pl.BlockSpec(memory_space=pltpu.MemorySpace.VMEM),         # node emb
            pl.BlockSpec(memory_space=pltpu.MemorySpace.VMEM),         # Wp flat
            pl.BlockSpec(memory_space=pltpu.MemorySpace.VMEM),         # Ww flat
            pl.BlockSpec(memory_space=pltpu.MemorySpace.VMEM),         # bias pool
            pl.BlockSpec(memory_space=pltpu.MemorySpace.VMEM),         # topo
            pl.BlockSpec(memory_space=pltpu.MemorySpace.SMEM),         # T scalars
        ],
        out_specs=pl.BlockSpec(memory_space=pltpu.MemorySpace.VMEM),
    )(x, x_window, node_embeddings, wp_flat, wwp_flat, bias_pool, topo, T_vec)


# --------------------------------------------------------------------------
# Pure-JAX reference (mirrors the PyTorch forward exactly)
# --------------------------------------------------------------------------
def reference_forward(x, x_window, E, zig, params):
    K = params["weights_pool"].shape[1]
    N = E.shape[0]
    s = jax.nn.softmax(
        jnp.maximum(jnp.einsum('nd,md->nm', E, E, precision=_HI), 0.0), axis=1)
    supp = [jnp.eye(N, dtype=jnp.float32), s]
    for k in range(2, K):
        supp.append(jnp.einsum('nm,mk->nk', s, supp[k - 1], precision=_HI))
    S = jnp.stack(supp, 0)
    weights = jnp.einsum('nd,dkio->nkio', E, params["weights_pool"], precision=_HI)
    bias = jnp.einsum('nd,do->no', E, params["bias_pool"], precision=_HI)
    x_g = jnp.einsum('knm,bmc->bknc', S, x, precision=_HI).transpose(0, 2, 1, 3)
    x_gconv = jnp.einsum('bnki,nkio->bno', x_g, weights, precision=_HI)
    ww = jnp.einsum('nd,dkio->nkio', E, params["weights_window"], precision=_HI)
    x_w1 = jnp.einsum('knm,btmi->btkni', S, x_window, precision=_HI).transpose(0, 1, 3, 2, 4)
    x_w = jnp.einsum('btnki,nkio->btno', x_w1, ww, precision=_HI).transpose(0, 2, 3, 1)
    x_wconv = jnp.einsum('bnot,t->bno', x_w, params["T"], precision=_HI)
    conv = lax.conv_general_dilated(
        zig, params["conv_w"], (1, 1), ((1, 1), (1, 1)),
        dimension_numbers=('NCHW', 'OIHW', 'NCHW'), precision=_HI)
    conv = jnp.maximum(conv + params["conv_b"][None, :, None, None], 0.0)
    topo = jnp.einsum('bc,co->bo', conv.mean(axis=(2, 3)), params["fc_w"],
                      precision=_HI) + params["fc_b"]
    return jnp.concatenate(
        [x_gconv * topo[:, None, :], x_wconv * topo[:, None, :]], -1) + bias


if __name__ == "__main__":
    # dim_in=4 -> (dim_in-1)%16 != 0 -> weights_window uses dim_in_w = dim_in//2
    B, N, Ci, dim_out = 2, 8, 4, 8
    Tw, K, D = 3, 3, 6          # window_len, link_len, embed_dim
    O2 = dim_out // 2
    Iw = Ci // 2
    C_cnn, H = 4, 8

    key = jax.random.PRNGKey(0)
    ks = jax.random.split(key, 12)
    params = {
        "weights_pool": 0.1 * jax.random.normal(ks[0], (D, K, Ci, O2), jnp.float32),
        "weights_window": 0.1 * jax.random.normal(ks[1], (D, K, Iw, O2), jnp.float32),
        "bias_pool": 0.1 * jax.random.normal(ks[2], (D, dim_out), jnp.float32),
        "T": 0.5 * jax.random.normal(ks[3], (Tw,), jnp.float32),
        "conv_w": 0.1 * jax.random.normal(ks[4], (C_cnn, 1, 3, 3), jnp.float32),
        "conv_b": 0.1 * jax.random.normal(ks[5], (C_cnn,), jnp.float32),
        "fc_w": 0.1 * jax.random.normal(ks[6], (C_cnn, O2), jnp.float32),
        "fc_b": 0.1 * jax.random.normal(ks[7], (O2,), jnp.float32),
    }
    x = jax.random.normal(ks[8], (B, N, Ci), jnp.float32)
    x_window = jax.random.normal(ks[9], (B, Tw, N, Iw), jnp.float32)
    node_emb = jax.random.normal(ks[10], (N, D), jnp.float32)
    zigzag_PI = jnp.abs(jax.random.normal(ks[11], (B, 1, H, H), jnp.float32))

    out = tlsgcn_forward(x, x_window, node_emb, zigzag_PI, params)
    out = jax.block_until_ready(out)

    ref = reference_forward(x, x_window, node_emb, zigzag_PI, params)
    assert out.shape == (B, N, dim_out), out.shape
    max_err = float(jnp.max(jnp.abs(out - ref)))
    assert bool(jnp.allclose(out, ref, rtol=1e-3, atol=1e-3)), max_err
    print("KERNEL_OK")
</pallas_src>

<mosaic_0001>
module attributes {stable_mosaic.version = 11 : i64} {
  func.func @_cnn_kernel(%arg0: memref<9x128xf32, #tpu.memory_space<vmem>>, %arg1: memref<4x9xf32, #tpu.memory_space<vmem>>, %arg2: memref<4x1xf32, #tpu.memory_space<vmem>>, %arg3: memref<2x128xf32, #tpu.memory_space<vmem>>, %arg4: memref<4x4xf32, #tpu.memory_space<vmem>>, %arg5: memref<1x4xf32, #tpu.memory_space<vmem>>, %arg6: memref<2x4xf32, #tpu.memory_space<vmem>>) attributes {dimension_semantics = [], scalar_prefetch = 0 : i64, scratch_operands = 0 : i64, tpu.core_type = #tpu.core_type<tc>} {
    %c0 = arith.constant 0 : index
    %c0_0 = arith.constant 0 : index
    %0 = vector.load %arg1[%c0, %c0_0] : memref<4x9xf32, #tpu.memory_space<vmem>>, vector<4x9xf32>
    %c0_1 = arith.constant 0 : index
    %c0_2 = arith.constant 0 : index
    %1 = vector.load %arg0[%c0_1, %c0_2] : memref<9x128xf32, #tpu.memory_space<vmem>>, vector<9x128xf32>
    %cst = arith.constant dense<0.000000e+00> : vector<4x128xf32>
    %2 = tpu.matmul %0, %1, %cst {dimension_numbers = #tpu.dot_dimension_numbers<[1], [0], [0], [1], [0, 0, 1, 1], [], []>, precision = #tpu.contract_precision<fp32>} : vector<4x9xf32>, vector<9x128xf32>, vector<4x128xf32> -> vector<4x128xf32>
    %c0_3 = arith.constant 0 : index
    %c0_4 = arith.constant 0 : index
    %3 = vector.load %arg2[%c0_3, %c0_4] : memref<4x1xf32, #tpu.memory_space<vmem>>, vector<4x1xf32>
    %4 = vector.broadcast %3 : vector<4x1xf32> to vector<4x128xf32>
    %5 = arith.addf %2, %4 : vector<4x128xf32>
    %cst_5 = arith.constant 0.000000e+00 : f32
    %6 = vector.broadcast %cst_5 : f32 to vector<4x128xf32>
    %7 = arith.maximumf %5, %6 : vector<4x128xf32>
    %c0_6 = arith.constant 0 : index
    %c0_7 = arith.constant 0 : index
    %8 = vector.load %arg3[%c0_6, %c0_7] : memref<2x128xf32, #tpu.memory_space<vmem>>, vector<2x128xf32>
    %cst_8 = arith.constant dense<0.000000e+00> : vector<2x4xf32>
    %9 = tpu.matmul %8, %7, %cst_8 {dimension_numbers = #tpu.dot_dimension_numbers<[1], [1], [0], [0], [0, 0, 1, 0], [], []>, precision = #tpu.contract_precision<fp32>} : vector<2x128xf32>, vector<4x128xf32>, vector<2x4xf32> -> vector<2x4xf32>
    %c0_9 = arith.constant 0 : index
    %c0_10 = arith.constant 0 : index
    %10 = vector.load %arg4[%c0_9, %c0_10] : memref<4x4xf32, #tpu.memory_space<vmem>>, vector<4x4xf32>
    %cst_11 = arith.constant dense<0.000000e+00> : vector<2x4xf32>
    %11 = tpu.matmul %9, %10, %cst_11 {dimension_numbers = #tpu.dot_dimension_numbers<[1], [0], [0], [1], [0, 0, 1, 1], [], []>, precision = #tpu.contract_precision<fp32>} : vector<2x4xf32>, vector<4x4xf32>, vector<2x4xf32> -> vector<2x4xf32>
    %c0_12 = arith.constant 0 : index
    %c0_13 = arith.constant 0 : index
    %12 = vector.load %arg5[%c0_12, %c0_13] : memref<1x4xf32, #tpu.memory_space<vmem>>, vector<1x4xf32>
    %13 = vector.broadcast %12 : vector<1x4xf32> to vector<2x4xf32>
    %14 = arith.addf %11, %13 : vector<2x4xf32>
    %c0_14 = arith.constant 0 : index
    %c0_15 = arith.constant 0 : index
    %15 = vector.load %arg6[%c0_14, %c0_15] : memref<2x4xf32, #tpu.memory_space<vmem>>, vector<2x4xf32>
    tpu.vector_store %arg6[%c0_14, %c0_15], %14 {strides = array<i32>} : memref<2x4xf32, #tpu.memory_space<vmem>>, vector<2x4xf32>,
    return
  }
}

</mosaic_0001>

<llo_original>
// kernel: tpu_custom_call.1
$region0: #{tpu_custom_call.1}
  #allocation0 [shape = 'u32[]', space=smem, size = 0x4, offset = 0x4, fixed_abs, tag = 'smem constant byte address 0x4 - core index']
  #allocation1 [shape = 'u32[144,128]{1,0:T(1,128)}', space=vmem, size = 0x12000, scoped, tag = 'internal scratch']
  %s0 = inlined_call_operand.hbm [shape: f32[9,128], index: 0, kind: input, shape index: {}]
  %s1 = inlined_call_operand.vmem [shape: f32[4,9], index: 1, kind: input, shape index: {}]
  %s2 = inlined_call_operand.vmem [shape: f32[4,1], index: 2, kind: input, shape index: {}]
  %s3 = inlined_call_operand.vmem [shape: f32[2,128], index: 3, kind: input, shape index: {}]
  %s4 = inlined_call_operand.vmem [shape: f32[4,4], index: 4, kind: input, shape index: {}]
  %s5 = inlined_call_operand.vmem [shape: f32[1,4], index: 5, kind: input, shape index: {}]
  %s6 = inlined_call_operand.hbm [shape: f32[2,4], index: 6, kind: output, shape index: {}]
  %s7 = sld [smem:[#allocation0]]
  $region38: #{tpu_custom_call.1} parent=0
    _
  %s9 = ssub.s32 1, %s7
  %s10 = scalar_select 0, %s9, %s7
  $region1: #{tpu_custom_call.1} parent=0
    #allocation2 [shape = 'u8[8192]{0}', space=vmem, size = 0x2000, scoped, tag = 'input window, operand 0, single buffered']
    #allocation3 [shape = 's32[1]{0}', space=sflag, size = 0x4, scoped, tag = 'scoped memory for tpu_custom_call.1']
    #allocation4 [shape = 's32[1]{0}', space=sflag, size = 0x4, scoped, tag = 'scoped memory for tpu_custom_call.1']
    #allocation5 [shape = 'u8[1024]{0}', space=vmem, size = 0x400, scoped, tag = 'output window, operand 0, single buffered']
    %11 = vsyncpa [#allocation3], 0
    %12 = vsyncpa [#allocation4], 0
    // Predicated region
    $region2: #{tpu_custom_call.1} parent=1 // pred_check
      _
    $region3: #{tpu_custom_call.1} parent=1 // pred_check_branch
      %14 = sbr.rel (0) target = $region5
    $region4: #{tpu_custom_call.1} parent=1 // pred_region
      %s16 = ssub.s32 256, 256
      %17 = vsyncadd [#allocation3], %s16
      %s18 = sshll.u32 [#allocation2], 4
      %s19 = int_to_ptr.vmem [resolvable:$true] %s18
      %24 = dma.hbm_to_vmem [thread:$0]  %s0, 256, %s19, [#allocation3], 128, 128, 8
    $region5: #{tpu_custom_call.1} parent=1 // pred_fallthru
      _
    // Predicated region
    $region6: #{tpu_custom_call.1} parent=1 // pred_check
      _
    $region7: #{tpu_custom_call.1} parent=1 // pred_check_branch
      %26 = sbr.rel (0) target = $region9
    $region8: #{tpu_custom_call.1} parent=1 // pred_region
      _
    $region9: #{tpu_custom_call.1} parent=1 // pred_fallthru
      _
    // Predicated region
    $region10: #{tpu_custom_call.1} parent=1 // pred_check
      _
    $region11: #{tpu_custom_call.1} parent=1 // pred_check_branch
      %28 = sbr.rel (0) target = $region13
    $region12: #{tpu_custom_call.1} parent=1 // pred_region
      _
    $region13: #{tpu_custom_call.1} parent=1 // pred_fallthru
      _
    // Predicated region
    $region14: #{tpu_custom_call.1} parent=1 // pred_check
      _
    $region15: #{tpu_custom_call.1} parent=1 // pred_check_branch
      %30 = sbr.rel (0) target = $region17
    $region16: #{tpu_custom_call.1} parent=1 // pred_region
      _
    $region17: #{tpu_custom_call.1} parent=1 // pred_fallthru
      _
    // Predicated region
    $region18: #{tpu_custom_call.1} parent=1 // pred_check
      _
    $region19: #{tpu_custom_call.1} parent=1 // pred_check_branch
      %32 = sbr.rel (0) target = $region21
    $region20: #{tpu_custom_call.1} parent=1 // pred_region
      _
    $region21: #{tpu_custom_call.1} parent=1 // pred_fallthru
      _
    // Predicated region
    $region22: #{tpu_custom_call.1} parent=1 // pred_check
      _
    $region23: #{tpu_custom_call.1} parent=1 // pred_check_branch
      %34 = sbr.rel (0) target = $region25
    $region24: #{tpu_custom_call.1} parent=1 // pred_region
      _
    $region25: #{tpu_custom_call.1} parent=1 // pred_fallthru
      _
    // Predicated region
    $region26: #{tpu_custom_call.1} parent=1 // pred_check
      _
    $region27: #{tpu_custom_call.1} parent=1 // pred_check_branch
      %36 = sbr.rel (0) target = $region29
    $region28: #{tpu_custom_call.1} parent=1 // pred_region
      %37 = dma.done [#allocation3], 256
    $region29: #{tpu_custom_call.1} parent=1 // pred_fallthru
      _
    %v38 = vld [vmem:[%s1] sm:$0xf]
    %v39 = vld [vmem:[#allocation2] sm:$0xff]
    %v40 = vld [vmem:[#allocation2 + $0x8] sm:$0x1]
    %v41 = vld [vmem:[%s2] sm:$0xf]
    %43 = vset.pattern.permute.xlu0 0
    %44 = vperm.xlu0 %43, %v41
    %v45 = vpop.permute.xlu0 %44
    %vm47 = vcmask 72704
    %v49 = vsel %vm47, %v38, 0
    %vm51 = vcmask 1040384
    %v53 = vsel %vm51, %v40, 0
    %55 = vmatprep.subr.mxu0 0.0
    %v56 = vand.u32 %v39, 4294901760
    %57 = vmatpush1.msra.mxu0 %v56
    %58 = vmatprep.subr.mxu0 0.0
    %v59 = vand.u32 %v53, 4294901760
    %60 = vmatpush1.msra.mxu0 %v59
    %61 = vmatprep.subr.mxu0 0.0
    %62 = vmatpush1.msra.mxu0 0.0
    %63 = vmatprep.subr.mxu0 0.0
    %64 = vmatpush1.msra.mxu0 0.0
    %65 = vmatprep.subr.mxu0 0.0
    %66 = vmatpush1.msra.mxu0 0.0
    %67 = vmatprep.subr.mxu0 0.0
    %68 = vmatpush1.msra.mxu0 0.0
    %69 = vmatprep.subr.mxu0 0.0
    %70 = vmatpush1.msra.mxu0 0.0
    %71 = vmatprep.subr.mxu0 0.0
    %72 = vmatpush1.msra.mxu0 0.0
    %73 = vmatprep.subr.mxu0 0.0
    %74 = vmatpush1.msra.mxu0 0.0
    %75 = vmatprep.subr.mxu0 0.0
    %76 = vmatpush1.msra.mxu0 0.0
    %77 = vmatprep.subr.mxu0 0.0
    %78 = vmatpush1.msra.mxu0 0.0
    %79 = vmatprep.subr.mxu0 0.0
    %80 = vmatpush1.msra.mxu0 0.0
    %81 = vmatprep.subr.mxu0 0.0
    %82 = vmatpush1.msra.mxu0 0.0
    %83 = vmatprep.subr.mxu0 0.0
    %84 = vmatpush1.msra.mxu0 0.0
    %85 = vmatprep.subr.mxu0 0.0
    %86 = vmatpush1.msra.mxu0 0.0
    %87 = vmatprep.subr.mxu0 0.0
    %88 = vmatpush1.msra.mxu0 0.0
    %89 = vmatprep.subr.mxu0 0.0
    %90 = vmatpush1.msra.mxu0 0.0
    %91 = vmatprep.subr.mxu0 0.0
    %92 = vmatpush1.msra.mxu0 0.0
    %93 = vmatprep.subr.mxu0 0.0
    %94 = vmatpush1.msra.mxu0 0.0
    %95 = vmatprep.subr.mxu0 0.0
    %96 = vmatpush1.msra.mxu0 0.0
    %97 = vmatprep.subr.mxu0 0.0
    %98 = vmatpush1.msra.mxu0 0.0
    %99 = vmatprep.subr.mxu0 0.0
    %100 = vmatpush1.msra.mxu0 0.0
    %101 = vmatprep.subr.mxu0 0.0
    %102 = vmatpush1.msra.mxu0 0.0
    %103 = vmatprep.subr.mxu0 0.0
    %104 = vmatpush1.msra.mxu0 0.0
    %105 = vmatprep.subr.mxu0 0.0
    %106 = vmatpush1.msra.mxu0 0.0
    %107 = vmatprep.subr.mxu0 0.0
    %108 = vmatpush1.msra.mxu0 0.0
    %109 = vmatprep.subr.mxu0 0.0
    %110 = vmatpush1.msra.mxu0 0.0
    %111 = vmatprep.subr.mxu0 0.0
    %112 = vmatpush1.msra.mxu0 0.0
    %113 = vmatprep.subr.mxu0 0.0
    %114 = vmatpush1.msra.mxu0 0.0
    %115 = vmatprep.subr.mxu0 0.0
    %116 = vmatpush1.msra.mxu0 0.0
    %117 = vmatprep.subr.mxu0 0.0
    %118 = vmatpush1.msra.mxu0 0.0
    %119 = vmatprep.subr.mxu0 0.0
    %120 = vmatpush1.msra.mxu0 0.0
    %121 = vmatprep.mubr.f32.mxu0 0.0
    %v122 = vand.u32 %v49, 4294901760
    %v123 = vsub.f32 %v49, %v122
    %v124 = vand.u32 %v123, 4294901760
    %v125 = vsub.f32 %v123, %v124
    %v126 = vand.u32 %v125, 4294901760
    %127 = vmatmul.mubr.f32.gmra.mrb[0].mxu0 %v126
    %v128 = vpop.f32.mrb[0].mxu0
    %v129 = vadd.f32 %v45, %v128
    %v130 = vpop.f32.mrb[0].mxu0
    %131 = vdwg.mxu0
    %132 = vmatprep.subr.mxu0 0.0
    %v133 = vand.u32 %v39, 4294901760
    %v134 = vsub.f32 %v39, %v133
    %v135 = vand.u32 %v134, 4294901760
    %v136 = vsub.f32 %v134, %v135
    %v137 = vand.u32 %v136, 4294901760
    %138 = vmatpush1.msra.mxu0 %v137
    %139 = vmatprep.subr.mxu0 0.0
    %v140 = vand.u32 %v53, 4294901760
    %v141 = vsub.f32 %v53, %v140
    %v142 = vand.u32 %v141, 4294901760
    %v143 = vsub.f32 %v141, %v142
    %v144 = vand.u32 %v143, 4294901760
    %145 = vmatpush1.msra.mxu0 %v144
    %146 = vmatprep.subr.mxu0 0.0
    %147 = vmatpush1.msra.mxu0 0.0
    %148 = vmatprep.subr.mxu0 0.0
    %149 = vmatpush1.msra.mxu0 0.0
    %150 = vmatprep.subr.mxu0 0.0
    %151 = vmatpush1.msra.mxu0 0.0
    %152 = vmatprep.subr.mxu0 0.0
    %153 = vmatpush1.msra.mxu0 0.0
    %154 = vmatprep.subr.mxu0 0.0
    %155 = vmatpush1.msra.mxu0 0.0
    %156 = vmatprep.subr.mxu0 0.0
    %157 = vmatpush1.msra.mxu0 0.0
    %158 = vmatprep.subr.mxu0 0.0
    %159 = vmatpush1.msra.mxu0 0.0
    %160 = vmatprep.subr.mxu0 0.0
    %161 = vmatpush1.msra.mxu0 0.0
    %162 = vmatprep.subr.mxu0 0.0
    %163 = vmatpush1.msra.mxu0 0.0
    %164 = vmatprep.subr.mxu0 0.0
    %165 = vmatpush1.msra.mxu0 0.0
    %166 = vmatprep.subr.mxu0 0.0
    %167 = vmatpush1.msra.mxu0 0.0
    %168 = vmatprep.subr.mxu0 0.0
    %169 = vmatpush1.msra.mxu0 0.0
    %170 = vmatprep.subr.mxu0 0.0
    %171 = vmatpush1.msra.mxu0 0.0
    %172 = vmatprep.subr.mxu0 0.0
    %173 = vmatpush1.msra.mxu0 0.0
    %174 = vmatprep.subr.mxu0 0.0
    %175 = vmatpush1.msra.mxu0 0.0
    %176 = vmatprep.subr.mxu0 0.0
    %177 = vmatpush1.msra.mxu0 0.0
    %178 = vmatprep.subr.mxu0 0.0
    %179 = vmatpush1.msra.mxu0 0.0
    %180 = vmatprep.subr.mxu0 0.0
    %181 = vmatpush1.msra.mxu0 0.0
    %182 = vmatprep.subr.mxu0 0.0
    %183 = vmatpush1.msra.mxu0 0.0
    %184 = vmatprep.subr.mxu0 0.0
    %185 = vmatpush1.msra.mxu0 0.0
    %186 = vmatprep.subr.mxu0 0.0
    %187 = vmatpush1.msra.mxu0 0.0
    %188 = vmatprep.subr.mxu0 0.0
    %189 = vmatpush1.msra.mxu0 0.0
    %190 = vmatprep.subr.mxu0 0.0
    %191 = vmatpush1.msra.mxu0 0.0
    %192 = vmatprep.subr.mxu0 0.0
    %193 = vmatpush1.msra.mxu0 0.0
    %194 = vmatprep.subr.mxu0 0.0
    %195 = vmatpush1.msra.mxu0 0.0
    %196 = vmatprep.subr.mxu0 0.0
    %197 = vmatpush1.msra.mxu0 0.0
    %198 = vmatprep.subr.mxu0 0.0
    %199 = vmatpush1.msra.mxu0 0.0
    %200 = vmatprep.subr.mxu0 0.0
    %201 = vmatpush1.msra.mxu0 0.0
    %202 = vmatprep.subr.mxu0 0.0
    %203 = vmatpush1.msra.mxu0 0.0
    %204 = vmatprep.subr.mxu0 0.0
    %205 = vmatpush1.msra.mxu0 0.0
    %206 = vmatprep.mubr.f32.mxu0 0.0
    %v207 = vand.u32 %v49, 4294901760
    %208 = vmatmul.mubr.f32.gmra.mrb[0].mxu0 %v207
    %v209 = vpop.f32.mrb[0].mxu0
    %v210 = vadd.f32 %v129, %v209
    %v211 = vpop.f32.mrb[0].mxu0
    %212 = vdwg.mxu0
    %213 = vmatprep.subr.mxu0 0.0
    %v214 = vand.u32 %v39, 4294901760
    %v215 = vsub.f32 %v39, %v214
    %216 = vmatpush1.msra.mxu0 %v215
    %217 = vmatprep.subr.mxu0 0.0
    %v218 = vand.u32 %v53, 4294901760
    %v219 = vsub.f32 %v53, %v218
    %220 = vmatpush1.msra.mxu0 %v219
    %221 = vmatprep.subr.mxu0 0.0
    %222 = vmatpush1.msra.mxu0 0.0
    %223 = vmatprep.subr.mxu0 0.0
    %224 = vmatpush1.msra.mxu0 0.0
    %225 = vmatprep.subr.mxu0 0.0
    %226 = vmatpush1.msra.mxu0 0.0
    %227 = vmatprep.subr.mxu0 0.0
    %228 = vmatpush1.msra.mxu0 0.0
    %229 = vmatprep.subr.mxu0 0.0
    %230 = vmatpush1.msra.mxu0 0.0
    %231 = vmatprep.subr.mxu0 0.0
    %232 = vmatpush1.msra.mxu0 0.0
    %233 = vmatprep.subr.mxu0 0.0
    %234 = vmatpush1.msra.mxu0 0.0
    %235 = vmatprep.subr.mxu0 0.0
    %236 = vmatpush1.msra.mxu0 0.0
    %237 = vmatprep.subr.mxu0 0.0
    %238 = vmatpush1.msra.mxu0 0.0
    %239 = vmatprep.subr.mxu0 0.0
    %240 = vmatpush1.msra.mxu0 0.0
    %241 = vmatprep.subr.mxu0 0.0
    %242 = vmatpush1.msra.mxu0 0.0
    %243 = vmatprep.subr.mxu0 0.0
    %244 = vmatpush1.msra.mxu0 0.0
    %245 = vmatprep.subr.mxu0 0.0
    %246 = vmatpush1.msra.mxu0 0.0
    %247 = vmatprep.subr.mxu0 0.0
    %248 = vmatpush1.msra.mxu0 0.0
    %249 = vmatprep.subr.mxu0 0.0
    %250 = vmatpush1.msra.mxu0 0.0
    %251 = vmatprep.subr.mxu0 0.0
    %252 = vmatpush1.msra.mxu0 0.0
    %253 = vmatprep.subr.mxu0 0.0
    %254 = vmatpush1.msra.mxu0 0.0
    %255 = vmatprep.subr.mxu0 0.0
    %256 = vmatpush1.msra.mxu0 0.0
    %257 = vmatprep.subr.mxu0 0.0
    %258 = vmatpush1.msra.mxu0 0.0
    %259 = vmatprep.subr.mxu0 0.0
    %260 = vmatpush1.msra.mxu0 0.0
    %261 = vmatprep.subr.mxu0 0.0
    %262 = vmatpush1.msra.mxu0 0.0
    %263 = vmatprep.subr.mxu0 0.0
    %264 = vmatpush1.msra.mxu0 0.0
    %265 = vmatprep.subr.mxu0 0.0
    %266 = vmatpush1.msra.mxu0 0.0
    %267 = vmatprep.subr.mxu0 0.0
    %268 = vmatpush1.msra.mxu0 0.0
    %269 = vmatprep.subr.mxu0 0.0
    %270 = vmatpush1.msra.mxu0 0.0
    %271 = vmatprep.subr.mxu0 0.0
    %272 = vmatpush1.msra.mxu0 0.0
    %273 = vmatprep.subr.mxu0 0.0
    %274 = vmatpush1.msra.mxu0 0.0
    %275 = vmatprep.subr.mxu0 0.0
    %276 = vmatpush1.msra.mxu0 0.0
    %277 = vmatprep.subr.mxu0 0.0
    %278 = vmatpush1.msra.mxu0 0.0
    %279 = vmatprep.subr.mxu0 0.0
    %280 = vmatpush1.msra.mxu0 0.0
    %281 = vmatprep.mubr.f32.mxu0 0.0
    %v282 = vand.u32 %v49, 4294901760
    %v283 = vsub.f32 %v49, %v282
    %284 = vmatmul.mubr.f32.gmra.mrb[0].mxu0 %v283
    %v285 = vpop.f32.mrb[0].mxu0
    %v286 = vadd.f32 %v210, %v285
    %v287 = vpop.f32.mrb[0].mxu0
    %288 = vdwg.mxu0
    %289 = vmatprep.subr.mxu0 0.0
    %v290 = vand.u32 %v39, 4294901760
    %291 = vmatpush1.msra.mxu0 %v290
    %292 = vmatprep.subr.mxu0 0.0
    %v293 = vand.u32 %v53, 4294901760
    %294 = vmatpush1.msra.mxu0 %v293
    %295 = vmatprep.subr.mxu0 0.0
    %296 = vmatpush1.msra.mxu0 0.0
    %297 = vmatprep.subr.mxu0 0.0
    %298 = vmatpush1.msra.mxu0 0.0
    %299 = vmatprep.subr.mxu0 0.0
    %300 = vmatpush1.msra.mxu0 0.0
    %301 = vmatprep.subr.mxu0 0.0
    %302 = vmatpush1.msra.mxu0 0.0
    %303 = vmatprep.subr.mxu0 0.0
    %304 = vmatpush1.msra.mxu0 0.0
    %305 = vmatprep.subr.mxu0 0.0
    %306 = vmatpush1.msra.mxu0 0.0
    %307 = vmatprep.subr.mxu0 0.0
    %308 = vmatpush1.msra.mxu0 0.0
    %309 = vmatprep.subr.mxu0 0.0
    %310 = vmatpush1.msra.mxu0 0.0
    %311 = vmatprep.subr.mxu0 0.0
    %312 = vmatpush1.msra.mxu0 0.0
    %313 = vmatprep.subr.mxu0 0.0
    %314 = vmatpush1.msra.mxu0 0.0
    %315 = vmatprep.subr.mxu0 0.0
    %316 = vmatpush1.msra.mxu0 0.0
    %317 = vmatprep.subr.mxu0 0.0
    %318 = vmatpush1.msra.mxu0 0.0
    %319 = vmatprep.subr.mxu0 0.0
    %320 = vmatpush1.msra.mxu0 0.0
    %321 = vmatprep.subr.mxu0 0.0
    %322 = vmatpush1.msra.mxu0 0.0
    %323 = vmatprep.subr.mxu0 0.0
    %324 = vmatpush1.msra.mxu0 0.0
    %325 = vmatprep.subr.mxu0 0.0
    %326 = vmatpush1.msra.mxu0 0.0
    %327 = vmatprep.subr.mxu0 0.0
    %328 = vmatpush1.msra.mxu0 0.0
    %329 = vmatprep.subr.mxu0 0.0
    %330 = vmatpush1.msra.mxu0 0.0
    %331 = vmatprep.subr.mxu0 0.0
    %332 = vmatpush1.msra.mxu0 0.0
    %333 = vmatprep.subr.mxu0 0.0
    %334 = vmatpush1.msra.mxu0 0.0
    %335 = vmatprep.subr.mxu0 0.0
    %336 = vmatpush1.msra.mxu0 0.0
    %337 = vmatprep.subr.mxu0 0.0
    %338 = vmatpush1.msra.mxu0 0.0
    %339 = vmatprep.subr.mxu0 0.0
    %340 = vmatpush1.msra.mxu0 0.0
    %341 = vmatprep.subr.mxu0 0.0
    %342 = vmatpush1.msra.mxu0 0.0
    %343 = vmatprep.subr.mxu0 0.0
    %344 = vmatpush1.msra.mxu0 0.0
    %345 = vmatprep.subr.mxu0 0.0
    %346 = vmatpush1.msra.mxu0 0.0
    %347 = vmatprep.subr.mxu0 0.0
    %348 = vmatpush1.msra.mxu0 0.0
    %349 = vmatprep.subr.mxu0 0.0
    %350 = vmatpush1.msra.mxu0 0.0
    %351 = vmatprep.subr.mxu0 0.0
    %352 = vmatpush1.msra.mxu0 0.0
    %353 = vmatprep.subr.mxu0 0.0
    %354 = vmatpush1.msra.mxu0 0.0
    %355 = vmatprep.mubr.f32.mxu0 0.0
    %v356 = vand.u32 %v49, 4294901760
    %v357 = vsub.f32 %v49, %v356
    %v358 = vand.u32 %v357, 4294901760
    %359 = vmatmul.mubr.f32.gmra.mrb[0].mxu0 %v358
    %v360 = vpop.f32.mrb[0].mxu0
    %v361 = vadd.f32 %v286, %v360
    %v362 = vpop.f32.mrb[0].mxu0
    %363 = vdwg.mxu0
    %364 = vmatprep.subr.mxu0 0.0
    %v365 = vand.u32 %v39, 4294901760
    %v366 = vsub.f32 %v39, %v365
    %v367 = vand.u32 %v366, 4294901760
    %368 = vmatpush1.msra.mxu0 %v367
    %369 = vmatprep.subr.mxu0 0.0
    %v370 = vand.u32 %v53, 4294901760
    %v371 = vsub.f32 %v53, %v370
    %v372 = vand.u32 %v371, 4294901760
    %373 = vmatpush1.msra.mxu0 %v372
    %374 = vmatprep.subr.mxu0 0.0
    %375 = vmatpush1.msra.mxu0 0.0
    %376 = vmatprep.subr.mxu0 0.0
    %377 = vmatpush1.msra.mxu0 0.0
    %378 = vmatprep.subr.mxu0 0.0
    %379 = vmatpush1.msra.mxu0 0.0
    %380 = vmatprep.subr.mxu0 0.0
    %381 = vmatpush1.msra.mxu0 0.0
    %382 = vmatprep.subr.mxu0 0.0
    %383 = vmatpush1.msra.mxu0 0.0
    %384 = vmatprep.subr.mxu0 0.0
    %385 = vmatpush1.msra.mxu0 0.0
    %386 = vmatprep.subr.mxu0 0.0
    %387 = vmatpush1.msra.mxu0 0.0
    %388 = vmatprep.subr.mxu0 0.0
    %389 = vmatpush1.msra.mxu0 0.0
    %390 = vmatprep.subr.mxu0 0.0
    %391 = vmatpush1.msra.mxu0 0.0
    %392 = vmatprep.subr.mxu0 0.0
    %393 = vmatpush1.msra.mxu0 0.0
    %394 = vmatprep.subr.mxu0 0.0
    %395 = vmatpush1.msra.mxu0 0.0
    %396 = vmatprep.subr.mxu0 0.0
    %397 = vmatpush1.msra.mxu0 0.0
    %398 = vmatprep.subr.mxu0 0.0
    %399 = vmatpush1.msra.mxu0 0.0
    %400 = vmatprep.subr.mxu0 0.0
    %401 = vmatpush1.msra.mxu0 0.0
    %402 = vmatprep.subr.mxu0 0.0
    %403 = vmatpush1.msra.mxu0 0.0
    %404 = vmatprep.subr.mxu0 0.0
    %405 = vmatpush1.msra.mxu0 0.0
    %406 = vmatprep.subr.mxu0 0.0
    %407 = vmatpush1.msra.mxu0 0.0
    %408 = vmatprep.subr.mxu0 0.0
    %409 = vmatpush1.msra.mxu0 0.0
    %410 = vmatprep.subr.mxu0 0.0
    %411 = vmatpush1.msra.mxu0 0.0
    %412 = vmatprep.subr.mxu0 0.0
    %413 = vmatpush1.msra.mxu0 0.0
    %414 = vmatprep.subr.mxu0 0.0
    %415 = vmatpush1.msra.mxu0 0.0
    %416 = vmatprep.subr.mxu0 0.0
    %417 = vmatpush1.msra.mxu0 0.0
    %418 = vmatprep.subr.mxu0 0.0
    %419 = vmatpush1.msra.mxu0 0.0
    %420 = vmatprep.subr.mxu0 0.0
    %421 = vmatpush1.msra.mxu0 0.0
    %422 = vmatprep.subr.mxu0 0.0
    %423 = vmatpush1.msra.mxu0 0.0
    %424 = vmatprep.subr.mxu0 0.0
    %425 = vmatpush1.msra.mxu0 0.0
    %426 = vmatprep.subr.mxu0 0.0
    %427 = vmatpush1.msra.mxu0 0.0
    %428 = vmatprep.subr.mxu0 0.0
    %429 = vmatpush1.msra.mxu0 0.0
    %430 = vmatprep.subr.mxu0 0.0
    %431 = vmatpush1.msra.mxu0 0.0
    %432 = vmatprep.subr.mxu0 0.0
    %433 = vmatpush1.msra.mxu0 0.0
    %434 = vmatprep.mubr.f32.mxu0 0.0
    %v435 = vand.u32 %v49, 4294901760
    %436 = vmatmul.mubr.f32.gmra.mrb[0].mxu0 %v435
    %v437 = vpop.f32.mrb[0].mxu0
    %v438 = vadd.f32 %v361, %v437
    %v439 = vpop.f32.mrb[0].mxu0
    %440 = vdwg.mxu0
    %441 = vmatprep.subr.mxu0 0.0
    %v442 = vand.u32 %v39, 4294901760
    %443 = vmatpush1.msra.mxu0 %v442
    %444 = vmatprep.subr.mxu0 0.0
    %v445 = vand.u32 %v53, 4294901760
    %446 = vmatpush1.msra.mxu0 %v445
    %447 = vmatprep.subr.mxu0 0.0
    %448 = vmatpush1.msra.mxu0 0.0
    %449 = vmatprep.subr.mxu0 0.0
    %450 = vmatpush1.msra.mxu0 0.0
    %451 = vmatprep.subr.mxu0 0.0
    %452 = vmatpush1.msra.mxu0 0.0
    %453 = vmatprep.subr.mxu0 0.0
    %454 = vmatpush1.msra.mxu0 0.0
    %455 = vmatprep.subr.mxu0 0.0
    %456 = vmatpush1.msra.mxu0 0.0
    %457 = vmatprep.subr.mxu0 0.0
    %458 = vmatpush1.msra.mxu0 0.0
    %459 = vmatprep.subr.mxu0 0.0
    %460 = vmatpush1.msra.mxu0 0.0
    %461 = vmatprep.subr.mxu0 0.0
    %462 = vmatpush1.msra.mxu0 0.0
    %463 = vmatprep.subr.mxu0 0.0
    %464 = vmatpush1.msra.mxu0 0.0
    %465 = vmatprep.subr.mxu0 0.0
    %466 = vmatpush1.msra.mxu0 0.0
    %467 = vmatprep.subr.mxu0 0.0
    %468 = vmatpush1.msra.mxu0 0.0
    %469 = vmatprep.subr.mxu0 0.0
    %470 = vmatpush1.msra.mxu0 0.0
    %471 = vmatprep.subr.mxu0 0.0
    %472 = vmatpush1.msra.mxu0 0.0
    %473 = vmatprep.subr.mxu0 0.0
    %474 = vmatpush1.msra.mxu0 0.0
    %475 = vmatprep.subr.mxu0 0.0
    %476 = vmatpush1.msra.mxu0 0.0
    %477 = vmatprep.subr.mxu0 0.0
    %478 = vmatpush1.msra.mxu0 0.0
    %479 = vmatprep.subr.mxu0 0.0
    %480 = vmatpush1.msra.mxu0 0.0
    %481 = vmatprep.subr.mxu0 0.0
    %482 = vmatpush1.msra.mxu0 0.0
    %483 = vmatprep.subr.mxu0 0.0
    %484 = vmatpush1.msra.mxu0 0.0
    %485 = vmatprep.subr.mxu0 0.0
    %486 = vmatpush1.msra.mxu0 0.0
    %487 = vmatprep.subr.mxu0 0.0
    %488 = vmatpush1.msra.mxu0 0.0
    %489 = vmatprep.subr.mxu0 0.0
    %490 = vmatpush1.msra.mxu0 0.0
    %491 = vmatprep.subr.mxu0 0.0
    %492 = vmatpush1.msra.mxu0 0.0
    %493 = vmatprep.subr.mxu0 0.0
    %494 = vmatpush1.msra.mxu0 0.0
    %495 = vmatprep.subr.mxu0 0.0
    %496 = vmatpush1.msra.mxu0 0.0
    %497 = vmatprep.subr.mxu0 0.0
    %498 = vmatpush1.msra.mxu0 0.0
    %499 = vmatprep.subr.mxu0 0.0
    %500 = vmatpush1.msra.mxu0 0.0
    %501 = vmatprep.subr.mxu0 0.0
    %502 = vmatpush1.msra.mxu0 0.0
    %503 = vmatprep.subr.mxu0 0.0
    %504 = vmatpush1.msra.mxu0 0.0
    %505 = vmatprep.subr.mxu0 0.0
    %506 = vmatpush1.msra.mxu0 0.0
    %507 = vmatprep.mubr.f32.mxu0 0.0
    %v508 = vand.u32 %v49, 4294901760
    %509 = vmatmul.mubr.f32.gmra.mrb[0].mxu0 %v508
    %v510 = vpop.f32.mrb[0].mxu0
    %v511 = vadd.f32 %v438, %v510
    %v512 = vpop.f32.mrb[0].mxu0
    %513 = vdwg.mxu0
    %v514 = vmax.f32 %v511, 0.0
    %v515 = vld [vmem:[%s3] sm:$0x3]
    %516 = vmatprep.subr.mxu0 0.0
    %v517 = vand.u32 %v514, 4294901760
    %518 = vmatpush1.xpose.msra.mxu0 %v517
    %519 = vmatprep.subr.mxu0 0.0
    %520 = vmatpush1.xpose.msra.mxu0 0.0
    %521 = vmatprep.subr.mxu0 0.0
    %522 = vmatpush1.xpose.msra.mxu0 0.0
    %523 = vmatprep.subr.mxu0 0.0
    %524 = vmatpush1.xpose.msra.mxu0 0.0
    %525 = vmatprep.subr.mxu0 0.0
    %526 = vmatpush1.xpose.msra.mxu0 0.0
    %527 = vmatprep.subr.mxu0 0.0
    %528 = vmatpush1.xpose.msra.mxu0 0.0
    %529 = vmatprep.subr.mxu0 0.0
    %530 = vmatpush1.xpose.msra.mxu0 0.0
    %531 = vmatprep.subr.mxu0 0.0
    %532 = vmatpush1.xpose.msra.mxu0 0.0
    %533 = vmatprep.subr.mxu0 0.0
    %534 = vmatpush1.xpose.msra.mxu0 0.0
    %535 = vmatprep.subr.mxu0 0.0
    %536 = vmatpush1.xpose.msra.mxu0 0.0
    %537 = vmatprep.subr.mxu0 0.0
    %538 = vmatpush1.xpose.msra.mxu0 0.0
    %539 = vmatprep.subr.mxu0 0.0
    %540 = vmatpush1.xpose.msra.mxu0 0.0
    %541 = vmatprep.subr.mxu0 0.0
    %542 = vmatpush1.xpose.msra.mxu0 0.0
    %543 = vmatprep.subr.mxu0 0.0
    %544 = vmatpush1.xpose.msra.mxu0 0.0
    %545 = vmatprep.subr.mxu0 0.0
    %546 = vmatpush1.xpose.msra.mxu0 0.0
    %547 = vmatprep.subr.mxu0 0.0
    %548 = vmatpush1.xpose.msra.mxu0 0.0
    %549 = vmatprep.subr.mxu0 0.0
    %550 = vmatpush1.xpose.msra.mxu0 0.0
    %551 = vmatprep.subr.mxu0 0.0
    %552 = vmatpush1.xpose.msra.mxu0 0.0
    %553 = vmatprep.subr.mxu0 0.0
    %554 = vmatpush1.xpose.msra.mxu0 0.0
    %555 = vmatprep.subr.mxu0 0.0
    %556 = vmatpush1.xpose.msra.mxu0 0.0
    %557 = vmatprep.subr.mxu0 0.0
    %558 = vmatpush1.xpose.msra.mxu0 0.0
    %559 = vmatprep.subr.mxu0 0.0
    %560 = vmatpush1.xpose.msra.mxu0 0.0
    %561 = vmatprep.subr.mxu0 0.0
    %562 = vmatpush1.xpose.msra.mxu0 0.0
    %563 = vmatprep.subr.mxu0 0.0
    %564 = vmatpush1.xpose.msra.mxu0 0.0
    %565 = vmatprep.subr.mxu0 0.0
    %566 = vmatpush1.xpose.msra.mxu0 0.0
    %567 = vmatprep.subr.mxu0 0.0
    %568 = vmatpush1.xpose.msra.mxu0 0.0
    %569 = vmatprep.subr.mxu0 0.0
    %570 = vmatpush1.xpose.msra.mxu0 0.0
    %571 = vmatprep.subr.mxu0 0.0
    %572 = vmatpush1.xpose.msra.mxu0 0.0
    %573 = vmatprep.subr.mxu0 0.0
    %574 = vmatpush1.xpose.msra.mxu0 0.0
    %575 = vmatprep.subr.mxu0 0.0
    %576 = vmatpush1.xpose.msra.mxu0 0.0
    %577 = vmatprep.subr.mxu0 0.0
    %578 = vmatpush1.xpose.msra.mxu0 0.0
    %579 = vmatprep.subr.mxu0 0.0
    %580 = vmatpush1.xpose.msra.mxu0 0.0
    %581 = vmatprep.mubr.f32.mxu0 0.0
    %v582 = vand.u32 %v515, 4294901760
    %v583 = vsub.f32 %v515, %v582
    %v584 = vand.u32 %v583, 4294901760
    %v585 = vsub.f32 %v583, %v584
    %v586 = vand.u32 %v585, 4294901760
    %587 = vmatmul.mubr.f32.gmra.mrb[0].mxu0 %v586
    %v588 = vpop.f32.mrb[0].mxu0
    %v589 = vadd.f32 0.0, %v588
    %v590 = vpop.f32.mrb[0].mxu0
    %591 = vdwg.mxu0
    %592 = vmatprep.subr.mxu0 0.0
    %v593 = vand.u32 %v514, 4294901760
    %v594 = vsub.f32 %v514, %v593
    %v595 = vand.u32 %v594, 4294901760
    %v596 = vsub.f32 %v594, %v595
    %v597 = vand.u32 %v596, 4294901760
    %598 = vmatpush1.xpose.msra.mxu0 %v597
    %599 = vmatprep.subr.mxu0 0.0
    %600 = vmatpush1.xpose.msra.mxu0 0.0
    %601 = vmatprep.subr.mxu0 0.0
    %602 = vmatpush1.xpose.msra.mxu0 0.0
    %603 = vmatprep.subr.mxu0 0.0
    %604 = vmatpush1.xpose.msra.mxu0 0.0
    %605 = vmatprep.subr.mxu0 0.0
    %606 = vmatpush1.xpose.msra.mxu0 0.0
    %607 = vmatprep.subr.mxu0 0.0
    %608 = vmatpush1.xpose.msra.mxu0 0.0
    %609 = vmatprep.subr.mxu0 0.0
    %610 = vmatpush1.xpose.msra.mxu0 0.0
    %611 = vmatprep.subr.mxu0 0.0
    %612 = vmatpush1.xpose.msra.mxu0 0.0
    %613 = vmatprep.subr.mxu0 0.0
    %614 = vmatpush1.xpose.msra.mxu0 0.0
    %615 = vmatprep.subr.mxu0 0.0
    %616 = vmatpush1.xpose.msra.mxu0 0.0
    %617 = vmatprep.subr.mxu0 0.0
    %618 = vmatpush1.xpose.msra.mxu0 0.0
    %619 = vmatprep.subr.mxu0 0.0
    %620 = vmatpush1.xpose.msra.mxu0 0.0
    %621 = vmatprep.subr.mxu0 0.0
    %622 = vmatpush1.xpose.msra.mxu0 0.0
    %623 = vmatprep.subr.mxu0 0.0
    %624 = vmatpush1.xpose.msra.mxu0 0.0
    %625 = vmatprep.subr.mxu0 0.0
    %626 = vmatpush1.xpose.msra.mxu0 0.0
    %627 = vmatprep.subr.mxu0 0.0
    %628 = vmatpush1.xpose.msra.mxu0 0.0
    %629 = vmatprep.subr.mxu0 0.0
    %630 = vmatpush1.xpose.msra.mxu0 0.0
    %631 = vmatprep.subr.mxu0 0.0
    %632 = vmatpush1.xpose.msra.mxu0 0.0
    %633 = vmatprep.subr.mxu0 0.0
    %634 = vmatpush1.xpose.msra.mxu0 0.0
    %635 = vmatprep.subr.mxu0 0.0
    %636 = vmatpush1.xpose.msra.mxu0 0.0
    %637 = vmatprep.subr.mxu0 0.0
    %638 = vmatpush1.xpose.msra.mxu0 0.0
    %639 = vmatprep.subr.mxu0 0.0
    %640 = vmatpush1.xpose.msra.mxu0 0.0
    %641 = vmatprep.subr.mxu0 0.0
    %642 = vmatpush1.xpose.msra.mxu0 0.0
    %643 = vmatprep.subr.mxu0 0.0
    %644 = vmatpush1.xpose.msra.mxu0 0.0
    %645 = vmatprep.subr.mxu0 0.0
    %646 = vmatpush1.xpose.msra.mxu0 0.0
    %647 = vmatprep.subr.mxu0 0.0
    %648 = vmatpush1.xpose.msra.mxu0 0.0
    %649 = vmatprep.subr.mxu0 0.0
    %650 = vmatpush1.xpose.msra.mxu0 0.0
    %651 = vmatprep.subr.mxu0 0.0
    %652 = vmatpush1.xpose.msra.mxu0 0.0
    %653 = vmatprep.subr.mxu0 0.0
    %654 = vmatpush1.xpose.msra.mxu0 0.0
    %655 = vmatprep.subr.mxu0 0.0
    %656 = vmatpush1.xpose.msra.mxu0 0.0
    %657 = vmatprep.subr.mxu0 0.0
    %658 = vmatpush1.xpose.msra.mxu0 0.0
    %659 = vmatprep.subr.mxu0 0.0
    %660 = vmatpush1.xpose.msra.mxu0 0.0
    %661 = vmatprep.mubr.f32.mxu0 0.0
    %v662 = vand.u32 %v515, 4294901760
    %663 = vmatmul.mubr.f32.gmra.mrb[0].mxu0 %v662
    %v664 = vpop.f32.mrb[0].mxu0
    %v665 = vadd.f32 %v589, %v664
    %v666 = vpop.f32.mrb[0].mxu0
    %667 = vdwg.mxu0
    %668 = vmatprep.subr.mxu0 0.0
    %v669 = vand.u32 %v514, 4294901760
    %v670 = vsub.f32 %v514, %v669
    %671 = vmatpush1.xpose.msra.mxu0 %v670
    %672 = vmatprep.subr.mxu0 0.0
    %673 = vmatpush1.xpose.msra.mxu0 0.0
    %674 = vmatprep.subr.mxu0 0.0
    %675 = vmatpush1.xpose.msra.mxu0 0.0
    %676 = vmatprep.subr.mxu0 0.0
    %677 = vmatpush1.xpose.msra.mxu0 0.0
    %678 = vmatprep.subr.mxu0 0.0
    %679 = vmatpush1.xpose.msra.mxu0 0.0
    %680 = vmatprep.subr.mxu0 0.0
    %681 = vmatpush1.xpose.msra.mxu0 0.0
    %682 = vmatprep.subr.mxu0 0.0
    %683 = vmatpush1.xpose.msra.mxu0 0.0
    %684 = vmatprep.subr.mxu0 0.0
    %685 = vmatpush1.xpose.msra.mxu0 0.0
    %686 = vmatprep.subr.mxu0 0.0
    %687 = vmatpush1.xpose.msra.mxu0 0.0
    %688 = vmatprep.subr.mxu0 0.0
    %689 = vmatpush1.xpose.msra.mxu0 0.0
    %690 = vmatprep.subr.mxu0 0.0
    %691 = vmatpush1.xpose.msra.mxu0 0.0
    %692 = vmatprep.subr.mxu0 0.0
    %693 = vmatpush1.xpose.msra.mxu0 0.0
    %694 = vmatprep.subr.mxu0 0.0
    %695 = vmatpush1.xpose.msra.mxu0 0.0
    %696 = vmatprep.subr.mxu0 0.0
    %697 = vmatpush1.xpose.msra.mxu0 0.0
    %698 = vmatprep.subr.mxu0 0.0
    %699 = vmatpush1.xpose.msra.mxu0 0.0
    %700 = vmatprep.subr.mxu0 0.0
    %701 = vmatpush1.xpose.msra.mxu0 0.0
    %702 = vmatprep.subr.mxu0 0.0
    %703 = vmatpush1.xpose.msra.mxu0 0.0
    %704 = vmatprep.subr.mxu0 0.0
    %705 = vmatpush1.xpose.msra.mxu0 0.0
    %706 = vmatprep.subr.mxu0 0.0
    %707 = vmatpush1.xpose.msra.mxu0 0.0
    %708 = vmatprep.subr.mxu0 0.0
    %709 = vmatpush1.xpose.msra.mxu0 0.0
    %710 = vmatprep.subr.mxu0 0.0
    %711 = vmatpush1.xpose.msra.mxu0 0.0
    %712 = vmatprep.subr.mxu0 0.0
    %713 = vmatpush1.xpose.msra.mxu0 0.0
    %714 = vmatprep.subr.mxu0 0.0
    %715 = vmatpush1.xpose.msra.mxu0 0.0
    %716 = vmatprep.subr.mxu0 0.0
    %717 = vmatpush1.xpose.msra.mxu0 0.0
    %718 = vmatprep.subr.mxu0 0.0
    %719 = vmatpush1.xpose.msra.mxu0 0.0
    %720 = vmatprep.subr.mxu0 0.0
    %721 = vmatpush1.xpose.msra.mxu0 0.0
    %722 = vmatprep.subr.mxu0 0.0
    %723 = vmatpush1.xpose.msra.mxu0 0.0
    %724 = vmatprep.subr.mxu0 0.0
    %725 = vmatpush1.xpose.msra.mxu0 0.0
    %726 = vmatprep.subr.mxu0 0.0
    %727 = vmatpush1.xpose.msra.mxu0 0.0
    %728 = vmatprep.subr.mxu0 0.0
    %729 = vmatpush1.xpose.msra.mxu0 0.0
    %730 = vmatprep.subr.mxu0 0.0
    %731 = vmatpush1.xpose.msra.mxu0 0.0
    %732 = vmatprep.subr.mxu0 0.0
    %733 = vmatpush1.xpose.msra.mxu0 0.0
    %734 = vmatprep.mubr.f32.mxu0 0.0
    %v735 = vand.u32 %v515, 4294901760
    %v736 = vsub.f32 %v515, %v735
    %737 = vmatmul.mubr.f32.gmra.mrb[0].mxu0 %v736
    %v738 = vpop.f32.mrb[0].mxu0
    %v739 = vadd.f32 %v665, %v738
    %v740 = vpop.f32.mrb[0].mxu0
    %741 = vdwg.mxu0
    %742 = vmatprep.subr.mxu0 0.0
    %v743 = vand.u32 %v514, 4294901760
    %744 = vmatpush1.xpose.msra.mxu0 %v743
    %745 = vmatprep.subr.mxu0 0.0
    %746 = vmatpush1.xpose.msra.mxu0 0.0
    %747 = vmatprep.subr.mxu0 0.0
    %748 = vmatpush1.xpose.msra.mxu0 0.0
    %749 = vmatprep.subr.mxu0 0.0
    %750 = vmatpush1.xpose.msra.mxu0 0.0
    %751 = vmatprep.subr.mxu0 0.0
    %752 = vmatpush1.xpose.msra.mxu0 0.0
    %753 = vmatprep.subr.mxu0 0.0
    %754 = vmatpush1.xpose.msra.mxu0 0.0
    %755 = vmatprep.subr.mxu0 0.0
    %756 = vmatpush1.xpose.msra.mxu0 0.0
    %757 = vmatprep.subr.mxu0 0.0
    %758 = vmatpush1.xpose.msra.mxu0 0.0
    %759 = vmatprep.subr.mxu0 0.0
    %760 = vmatpush1.xpose.msra.mxu0 0.0
    %761 = vmatprep.subr.mxu0 0.0
    %762 = vmatpush1.xpose.msra.mxu0 0.0
    %763 = vmatprep.subr.mxu0 0.0
    %764 = vmatpush1.xpose.msra.mxu0 0.0
    %765 = vmatprep.subr.mxu0 0.0
    %766 = vmatpush1.xpose.msra.mxu0 0.0
    %767 = vmatprep.subr.mxu0 0.0
    %768 = vmatpush1.xpose.msra.mxu0 0.0
    %769 = vmatprep.subr.mxu0 0.0
    %770 = vmatpush1.xpose.msra.mxu0 0.0
    %771 = vmatprep.subr.mxu0 0.0
    %772 = vmatpush1.xpose.msra.mxu0 0.0
    %773 = vmatprep.subr.mxu0 0.0
    %774 = vmatpush1.xpose.msra.mxu0 0.0
    %775 = vmatprep.subr.mxu0 0.0
    %776 = vmatpush1.xpose.msra.mxu0 0.0
    %777 = vmatprep.subr.mxu0 0.0
    %778 = vmatpush1.xpose.msra.mxu0 0.0
    %779 = vmatprep.subr.mxu0 0.0
    %780 = vmatpush1.xpose.msra.mxu0 0.0
    %781 = vmatprep.subr.mxu0 0.0
    %782 = vmatpush1.xpose.msra.mxu0 0.0
    %783 = vmatprep.subr.mxu0 0.0
    %784 = vmatpush1.xpose.msra.mxu0 0.0
    %785 = vmatprep.subr.mxu0 0.0
    %786 = vmatpush1.xpose.msra.mxu0 0.0
    %787 = vmatprep.subr.mxu0 0.0
    %788 = vmatpush1.xpose.msra.mxu0 0.0
    %789 = vmatprep.subr.mxu0 0.0
    %790 = vmatpush1.xpose.msra.mxu0 0.0
    %791 = vmatprep.subr.mxu0 0.0
    %792 = vmatpush1.xpose.msra.mxu0 0.0
    %793 = vmatprep.subr.mxu0 0.0
    %794 = vmatpush1.xpose.msra.mxu0 0.0
    %795 = vmatprep.subr.mxu0 0.0
    %796 = vmatpush1.xpose.msra.mxu0 0.0
    %797 = vmatprep.subr.mxu0 0.0
    %798 = vmatpush1.xpose.msra.mxu0 0.0
    %799 = vmatprep.subr.mxu0 0.0
    %800 = vmatpush1.xpose.msra.mxu0 0.0
    %801 = vmatprep.subr.mxu0 0.0
    %802 = vmatpush1.xpose.msra.mxu0 0.0
    %803 = vmatprep.subr.mxu0 0.0
    %804 = vmatpush1.xpose.msra.mxu0 0.0
    %805 = vmatprep.subr.mxu0 0.0
    %806 = vmatpush1.xpose.msra.mxu0 0.0
    %807 = vmatprep.mubr.f32.mxu0 0.0
    %v808 = vand.u32 %v515, 4294901760
    %v809 = vsub.f32 %v515, %v808
    %v810 = vand.u32 %v809, 4294901760
    %811 = vmatmul.mubr.f32.gmra.mrb[0].mxu0 %v810
    %v812 = vpop.f32.mrb[0].mxu0
    %v813 = vadd.f32 %v739, %v812
    %v814 = vpop.f32.mrb[0].mxu0
    %815 = vdwg.mxu0
    %816 = vmatprep.subr.mxu0 0.0
    %v817 = vand.u32 %v514, 4294901760
    %v818 = vsub.f32 %v514, %v817
    %v819 = vand.u32 %v818, 4294901760
    %820 = vmatpush1.xpose.msra.mxu0 %v819
    %821 = vmatprep.subr.mxu0 0.0
    %822 = vmatpush1.xpose.msra.mxu0 0.0
    %823 = vmatprep.subr.mxu0 0.0
    %824 = vmatpush1.xpose.msra.mxu0 0.0
    %825 = vmatprep.subr.mxu0 0.0
    %826 = vmatpush1.xpose.msra.mxu0 0.0
    %827 = vmatprep.subr.mxu0 0.0
    %828 = vmatpush1.xpose.msra.mxu0 0.0
    %829 = vmatprep.subr.mxu0 0.0
    %830 = vmatpush1.xpose.msra.mxu0 0.0
    %831 = vmatprep.subr.mxu0 0.0
    %832 = vmatpush1.xpose.msra.mxu0 0.0
    %833 = vmatprep.subr.mxu0 0.0
    %834 = vmatpush1.xpose.msra.mxu0 0.0
    %835 = vmatprep.subr.mxu0 0.0
    %836 = vmatpush1.xpose.msra.mxu0 0.0
    %837 = vmatprep.subr.mxu0 0.0
    %838 = vmatpush1.xpose.msra.mxu0 0.0
    %839 = vmatprep.subr.mxu0 0.0
    %840 = vmatpush1.xpose.msra.mxu0 0.0
    %841 = vmatprep.subr.mxu0 0.0
    %842 = vmatpush1.xpose.msra.mxu0 0.0
    %843 = vmatprep.subr.mxu0 0.0
    %844 = vmatpush1.xpose.msra.mxu0 0.0
    %845 = vmatprep.subr.mxu0 0.0
    %846 = vmatpush1.xpose.msra.mxu0 0.0
    %847 = vmatprep.subr.mxu0 0.0
    %848 = vmatpush1.xpose.msra.mxu0 0.0
    %849 = vmatprep.subr.mxu0 0.0
    %850 = vmatpush1.xpose.msra.mxu0 0.0
    %851 = vmatprep.subr.mxu0 0.0
    %852 = vmatpush1.xpose.msra.mxu0 0.0
    %853 = vmatprep.subr.mxu0 0.0
    %854 = vmatpush1.xpose.msra.mxu0 0.0
    %855 = vmatprep.subr.mxu0 0.0
    %856 = vmatpush1.xpose.msra.mxu0 0.0
    %857 = vmatprep.subr.mxu0 0.0
    %858 = vmatpush1.xpose.msra.mxu0 0.0
    %859 = vmatprep.subr.mxu0 0.0
    %860 = vmatpush1.xpose.msra.mxu0 0.0
    %861 = vmatprep.subr.mxu0 0.0
    %862 = vmatpush1.xpose.msra.mxu0 0.0
    %863 = vmatprep.subr.mxu0 0.0
    %864 = vmatpush1.xpose.msra.mxu0 0.0
    %865 = vmatprep.subr.mxu0 0.0
    %866 = vmatpush1.xpose.msra.mxu0 0.0
    %867 = vmatprep.subr.mxu0 0.0
    %868 = vmatpush1.xpose.msra.mxu0 0.0
    %869 = vmatprep.subr.mxu0 0.0
    %870 = vmatpush1.xpose.msra.mxu0 0.0
    %871 = vmatprep.subr.mxu0 0.0
    %872 = vmatpush1.xpose.msra.mxu0 0.0
    %873 = vmatprep.subr.mxu0 0.0
    %874 = vmatpush1.xpose.msra.mxu0 0.0
    %875 = vmatprep.subr.mxu0 0.0
    %876 = vmatpush1.xpose.msra.mxu0 0.0
    %877 = vmatprep.subr.mxu0 0.0
    %878 = vmatpush1.xpose.msra.mxu0 0.0
    %879 = vmatprep.subr.mxu0 0.0
    %880 = vmatpush1.xpose.msra.mxu0 0.0
    %881 = vmatprep.subr.mxu0 0.0
    %882 = vmatpush1.xpose.msra.mxu0 0.0
    %883 = vmatprep.mubr.f32.mxu0 0.0
    %v884 = vand.u32 %v515, 4294901760
    %885 = vmatmul.mubr.f32.gmra.mrb[0].mxu0 %v884
    %v886 = vpop.f32.mrb[0].mxu0
    %v887 = vadd.f32 %v813, %v886
    %v888 = vpop.f32.mrb[0].mxu0
    %889 = vdwg.mxu0
    %890 = vmatprep.subr.mxu0 0.0
    %v891 = vand.u32 %v514, 4294901760
    %892 = vmatpush1.xpose.msra.mxu0 %v891
    %893 = vmatprep.subr.mxu0 0.0
    %894 = vmatpush1.xpose.msra.mxu0 0.0
    %895 = vmatprep.subr.mxu0 0.0
    %896 = vmatpush1.xpose.msra.mxu0 0.0
    %897 = vmatprep.subr.mxu0 0.0
    %898 = vmatpush1.xpose.msra.mxu0 0.0
    %899 = vmatprep.subr.mxu0 0.0
    %900 = vmatpush1.xpose.msra.mxu0 0.0
    %901 = vmatprep.subr.mxu0 0.0
    %902 = vmatpush1.xpose.msra.mxu0 0.0
    %903 = vmatprep.subr.mxu0 0.0
    %904 = vmatpush1.xpose.msra.mxu0 0.0
    %905 = vmatprep.subr.mxu0 0.0
    %906 = vmatpush1.xpose.msra.mxu0 0.0
    %907 = vmatprep.subr.mxu0 0.0
    %908 = vmatpush1.xpose.msra.mxu0 0.0
    %909 = vmatprep.subr.mxu0 0.0
    %910 = vmatpush1.xpose.msra.mxu0 0.0
    %911 = vmatprep.subr.mxu0 0.0
    %912 = vmatpush1.xpose.msra.mxu0 0.0
    %913 = vmatprep.subr.mxu0 0.0
    %914 = vmatpush1.xpose.msra.mxu0 0.0
    %915 = vmatprep.subr.mxu0 0.0
    %916 = vmatpush1.xpose.msra.mxu0 0.0
    %917 = vmatprep.subr.mxu0 0.0
    %918 = vmatpush1.xpose.msra.mxu0 0.0
    %919 = vmatprep.subr.mxu0 0.0
    %920 = vmatpush1.xpose.msra.mxu0 0.0
    %921 = vmatprep.subr.mxu0 0.0
    %922 = vmatpush1.xpose.msra.mxu0 0.0
    %923 = vmatprep.subr.mxu0 0.0
    %924 = vmatpush1.xpose.msra.mxu0 0.0
    %925 = vmatprep.subr.mxu0 0.0
    %926 = vmatpush1.xpose.msra.mxu0 0.0
    %927 = vmatprep.subr.mxu0 0.0
    %928 = vmatpush1.xpose.msra.mxu0 0.0
    %929 = vmatprep.subr.mxu0 0.0
    %930 = vmatpush1.xpose.msra.mxu0 0.0
    %931 = vmatprep.subr.mxu0 0.0
    %932 = vmatpush1.xpose.msra.mxu0 0.0
    %933 = vmatprep.subr.mxu0 0.0
    %934 = vmatpush1.xpose.msra.mxu0 0.0
    %935 = vmatprep.subr.mxu0 0.0
    %936 = vmatpush1.xpose.msra.mxu0 0.0
    %937 = vmatprep.subr.mxu0 0.0
    %938 = vmatpush1.xpose.msra.mxu0 0.0
    %939 = vmatprep.subr.mxu0 0.0
    %940 = vmatpush1.xpose.msra.mxu0 0.0
    %941 = vmatprep.subr.mxu0 0.0
    %942 = vmatpush1.xpose.msra.mxu0 0.0
    %943 = vmatprep.subr.mxu0 0.0
    %944 = vmatpush1.xpose.msra.mxu0 0.0
    %945 = vmatprep.subr.mxu0 0.0
    %946 = vmatpush1.xpose.msra.mxu0 0.0
    %947 = vmatprep.subr.mxu0 0.0
    %948 = vmatpush1.xpose.msra.mxu0 0.0
    %949 = vmatprep.subr.mxu0 0.0
    %950 = vmatpush1.xpose.msra.mxu0 0.0
    %951 = vmatprep.subr.mxu0 0.0
    %952 = vmatpush1.xpose.msra.mxu0 0.0
    %953 = vmatprep.subr.mxu0 0.0
    %954 = vmatpush1.xpose.msra.mxu0 0.0
    %955 = vmatprep.mubr.f32.mxu0 0.0
    %v956 = vand.u32 %v515, 4294901760
    %957 = vmatmul.mubr.f32.gmra.mrb[0].mxu0 %v956
    %v958 = vpop.f32.mrb[0].mxu0
    %v959 = vadd.f32 %v887, %v958
    %v960 = vpop.f32.mrb[0].mxu0
    %961 = vdwg.mxu0
    %v962 = vld [vmem:[%s4] sm:$0xf]
    %v963 = vld [vmem:[%s5] sm:$0x1]
    %v965 = vlaneseq
    %v966 = vshrl.u32 %v965, 7
    %v967 = vsub.s32 0, %v966
    %v968 = vrot.slane %v963, %v967
    %vm970 = vcmask 31744
    %v972 = vsel %vm970, %v959, 0
    %vm974 = vcmask 1043456
    %v976 = vsel %vm974, %v962, 0
    %978 = vmatprep.subr.mxu0 0.0
    %v979 = vand.u32 %v976, 4294901760
    %980 = vmatpush1.msra.mxu0 %v979
    %981 = vmatprep.subr.mxu0 0.0
    %982 = vmatpush1.msra.mxu0 0.0
    %983 = vmatprep.subr.mxu0 0.0
    %984 = vmatpush1.msra.mxu0 0.0
    %985 = vmatprep.subr.mxu0 0.0
    %986 = vmatpush1.msra.mxu0 0.0
    %987 = vmatprep.subr.mxu0 0.0
    %988 = vmatpush1.msra.mxu0 0.0
    %989 = vmatprep.subr.mxu0 0.0
    %990 = vmatpush1.msra.mxu0 0.0
    %991 = vmatprep.subr.mxu0 0.0
    %992 = vmatpush1.msra.mxu0 0.0
    %993 = vmatprep.subr.mxu0 0.0
    %994 = vmatpush1.msra.mxu0 0.0
    %995 = vmatprep.subr.mxu0 0.0
    %996 = vmatpush1.msra.mxu0 0.0
    %997 = vmatprep.subr.mxu0 0.0
    %998 = vmatpush1.msra.mxu0 0.0
    %999 = vmatprep.subr.mxu0 0.0
    %1000 = vmatpush1.msra.mxu0 0.0
    %1001 = vmatprep.subr.mxu0 0.0
    %1002 = vmatpush1.msra.mxu0 0.0
    %1003 = vmatprep.subr.mxu0 0.0
    %1004 = vmatpush1.msra.mxu0 0.0
    %1005 = vmatprep.subr.mxu0 0.0
    %1006 = vmatpush1.msra.mxu0 0.0
    %1007 = vmatprep.subr.mxu0 0.0
    %1008 = vmatpush1.msra.mxu0 0.0
    %1009 = vmatprep.subr.mxu0 0.0
    %1010 = vmatpush1.msra.mxu0 0.0
    %1011 = vmatprep.subr.mxu0 0.0
    %1012 = vmatpush1.msra.mxu0 0.0
    %1013 = vmatprep.subr.mxu0 0.0
    %1014 = vmatpush1.msra.mxu0 0.0
    %1015 = vmatprep.subr.mxu0 0.0
    %1016 = vmatpush1.msra.mxu0 0.0
    %1017 = vmatprep.subr.mxu0 0.0
    %1018 = vmatpush1.msra.mxu0 0.0
    %1019 = vmatprep.subr.mxu0 0.0
    %1020 = vmatpush1.msra.mxu0 0.0
    %1021 = vmatprep.subr.mxu0 0.0
    %1022 = vmatpush1.msra.mxu0 0.0
    %1023 = vmatprep.subr.mxu0 0.0
    %1024 = vmatpush1.msra.mxu0 0.0
    %1025 = vmatprep.subr.mxu0 0.0
    %1026 = vmatpush1.msra.mxu0 0.0
    %1027 = vmatprep.subr.mxu0 0.0
    %1028 = vmatpush1.msra.mxu0 0.0
    %1029 = vmatprep.subr.mxu0 0.0
    %1030 = vmatpush1.msra.mxu0 0.0
    %1031 = vmatprep.subr.mxu0 0.0
    %1032 = vmatpush1.msra.mxu0 0.0
    %1033 = vmatprep.subr.mxu0 0.0
    %1034 = vmatpush1.msra.mxu0 0.0
    %1035 = vmatprep.subr.mxu0 0.0
    %1036 = vmatpush1.msra.mxu0 0.0
    %1037 = vmatprep.subr.mxu0 0.0
    %1038 = vmatpush1.msra.mxu0 0.0
    %1039 = vmatprep.subr.mxu0 0.0
    %1040 = vmatpush1.msra.mxu0 0.0
    %1041 = vmatprep.subr.mxu0 0.0
    %1042 = vmatpush1.msra.mxu0 0.0
    %1043 = vmatprep.mubr.f32.mxu0 0.0
    %v1044 = vand.u32 %v972, 4294901760
    %v1045 = vsub.f32 %v972, %v1044
    %v1046 = vand.u32 %v1045, 4294901760
    %v1047 = vsub.f32 %v1045, %v1046
    %v1048 = vand.u32 %v1047, 4294901760
    %1049 = vmatmul.mubr.f32.gmra.mrb[0].mxu0 %v1048
    %v1050 = vpop.f32.mrb[0].mxu0
    %v1051 = vadd.f32 %v968, %v1050
    %v1052 = vpop.f32.mrb[0].mxu0
    %1053 = vdwg.mxu0
    %1054 = vmatprep.subr.mxu0 0.0
    %v1055 = vand.u32 %v976, 4294901760
    %v1056 = vsub.f32 %v976, %v1055
    %v1057 = vand.u32 %v1056, 4294901760
    %v1058 = vsub.f32 %v1056, %v1057
    %v1059 = vand.u32 %v1058, 4294901760
    %1060 = vmatpush1.msra.mxu0 %v1059
    %1061 = vmatprep.subr.mxu0 0.0
    %1062 = vmatpush1.msra.mxu0 0.0
    %1063 = vmatprep.subr.mxu0 0.0
    %1064 = vmatpush1.msra.mxu0 0.0
    %1065 = vmatprep.subr.mxu0 0.0
    %1066 = vmatpush1.msra.mxu0 0.0
    %1067 = vmatprep.subr.mxu0 0.0
    %1068 = vmatpush1.msra.mxu0 0.0
    %1069 = vmatprep.subr.mxu0 0.0
    %1070 = vmatpush1.msra.mxu0 0.0
    %1071 = vmatprep.subr.mxu0 0.0
    %1072 = vmatpush1.msra.mxu0 0.0
    %1073 = vmatprep.subr.mxu0 0.0
    %1074 = vmatpush1.msra.mxu0 0.0
    %1075 = vmatprep.subr.mxu0 0.0
    %1076 = vmatpush1.msra.mxu0 0.0
    %1077 = vmatprep.subr.mxu0 0.0
    %1078 = vmatpush1.msra.mxu0 0.0
    %1079 = vmatprep.subr.mxu0 0.0
    %1080 = vmatpush1.msra.mxu0 0.0
    %1081 = vmatprep.subr.mxu0 0.0
    %1082 = vmatpush1.msra.mxu0 0.0
    %1083 = vmatprep.subr.mxu0 0.0
    %1084 = vmatpush1.msra.mxu0 0.0
    %1085 = vmatprep.subr.mxu0 0.0
    %1086 = vmatpush1.msra.mxu0 0.0
    %1087 = vmatprep.subr.mxu0 0.0
    %1088 = vmatpush1.msra.mxu0 0.0
    %1089 = vmatprep.subr.mxu0 0.0
    %1090 = vmatpush1.msra.mxu0 0.0
    %1091 = vmatprep.subr.mxu0 0.0
    %1092 = vmatpush1.msra.mxu0 0.0
    %1093 = vmatprep.subr.mxu0 0.0
    %1094 = vmatpush1.msra.mxu0 0.0
    %1095 = vmatprep.subr.mxu0 0.0
    %1096 = vmatpush1.msra.mxu0 0.0
    %1097 = vmatprep.subr.mxu0 0.0
    %1098 = vmatpush1.msra.mxu0 0.0
    %1099 = vmatprep.subr.mxu0 0.0
    %1100 = vmatpush1.msra.mxu0 0.0
    %1101 = vmatprep.subr.mxu0 0.0
    %1102 = vmatpush1.msra.mxu0 0.0
    %1103 = vmatprep.subr.mxu0 0.0
    %1104 = vmatpush1.msra.mxu0 0.0
    %1105 = vmatprep.subr.mxu0 0.0
    %1106 = vmatpush1.msra.mxu0 0.0
    %1107 = vmatprep.subr.mxu0 0.0
    %1108 = vmatpush1.msra.mxu0 0.0
    %1109 = vmatprep.subr.mxu0 0.0
    %1110 = vmatpush1.msra.mxu0 0.0
    %1111 = vmatprep.subr.mxu0 0.0
    %1112 = vmatpush1.msra.mxu0 0.0
    %1113 = vmatprep.subr.mxu0 0.0
    %1114 = vmatpush1.msra.mxu0 0.0
    %1115 = vmatprep.subr.mxu0 0.0
    %1116 = vmatpush1.msra.mxu0 0.0
    %1117 = vmatprep.subr.mxu0 0.0
    %1118 = vmatpush1.msra.mxu0 0.0
    %1119 = vmatprep.subr.mxu0 0.0
    %1120 = vmatpush1.msra.mxu0 0.0
    %1121 = vmatprep.subr.mxu0 0.0
    %1122 = vmatpush1.msra.mxu0 0.0
    %1123 = vmatprep.mubr.f32.mxu0 0.0
    %v1124 = vand.u32 %v972, 4294901760
    %1125 = vmatmul.mubr.f32.gmra.mrb[0].mxu0 %v1124
    %v1126 = vpop.f32.mrb[0].mxu0
    %v1127 = vadd.f32 %v1051, %v1126
    %v1128 = vpop.f32.mrb[0].mxu0
    %1129 = vdwg.mxu0
    %1130 = vmatprep.subr.mxu0 0.0
    %v1131 = vand.u32 %v976, 4294901760
    %v1132 = vsub.f32 %v976, %v1131
    %1133 = vmatpush1.msra.mxu0 %v1132
    %1134 = vmatprep.subr.mxu0 0.0
    %1135 = vmatpush1.msra.mxu0 0.0
    %1136 = vmatprep.subr.mxu0 0.0
    %1137 = vmatpush1.msra.mxu0 0.0
    %1138 = vmatprep.subr.mxu0 0.0
    %1139 = vmatpush1.msra.mxu0 0.0
    %1140 = vmatprep.subr.mxu0 0.0
    %1141 = vmatpush1.msra.mxu0 0.0
    %1142 = vmatprep.subr.mxu0 0.0
    %1143 = vmatpush1.msra.mxu0 0.0
    %1144 = vmatprep.subr.mxu0 0.0
    %1145 = vmatpush1.msra.mxu0 0.0
    %1146 = vmatprep.subr.mxu0 0.0
    %1147 = vmatpush1.msra.mxu0 0.0
    %1148 = vmatprep.subr.mxu0 0.0
    %1149 = vmatpush1.msra.mxu0 0.0
    %1150 = vmatprep.subr.mxu0 0.0
    %1151 = vmatpush1.msra.mxu0 0.0
    %1152 = vmatprep.subr.mxu0 0.0
    %1153 = vmatpush1.msra.mxu0 0.0
    %1154 = vmatprep.subr.mxu0 0.0
    %1155 = vmatpush1.msra.mxu0 0.0
    %1156 = vmatprep.subr.mxu0 0.0
    %1157 = vmatpush1.msra.mxu0 0.0
    %1158 = vmatprep.subr.mxu0 0.0
    %1159 = vmatpush1.msra.mxu0 0.0
    %1160 = vmatprep.subr.mxu0 0.0
    %1161 = vmatpush1.msra.mxu0 0.0
    %1162 = vmatprep.subr.mxu0 0.0
    %1163 = vmatpush1.msra.mxu0 0.0
    %1164 = vmatprep.subr.mxu0 0.0
    %1165 = vmatpush1.msra.mxu0 0.0
    %1166 = vmatprep.subr.mxu0 0.0
    %1167 = vmatpush1.msra.mxu0 0.0
    %1168 = vmatprep.subr.mxu0 0.0
    %1169 = vmatpush1.msra.mxu0 0.0
    %1170 = vmatprep.subr.mxu0 0.0
    %1171 = vmatpush1.msra.mxu0 0.0
    %1172 = vmatprep.subr.mxu0 0.0
    %1173 = vmatpush1.msra.mxu0 0.0
    %1174 = vmatprep.subr.mxu0 0.0
    %1175 = vmatpush1.msra.mxu0 0.0
    %1176 = vmatprep.subr.mxu0 0.0
    %1177 = vmatpush1.msra.mxu0 0.0
    %1178 = vmatprep.subr.mxu0 0.0
    %1179 = vmatpush1.msra.mxu0 0.0
    %1180 = vmatprep.subr.mxu0 0.0
    %1181 = vmatpush1.msra.mxu0 0.0
    %1182 = vmatprep.subr.mxu0 0.0
    %1183 = vmatpush1.msra.mxu0 0.0
    %1184 = vmatprep.subr.mxu0 0.0
    %1185 = vmatpush1.msra.mxu0 0.0
    %1186 = vmatprep.subr.mxu0 0.0
    %1187 = vmatpush1.msra.mxu0 0.0
    %1188 = vmatprep.subr.mxu0 0.0
    %1189 = vmatpush1.msra.mxu0 0.0
    %1190 = vmatprep.subr.mxu0 0.0
    %1191 = vmatpush1.msra.mxu0 0.0
    %1192 = vmatprep.subr.mxu0 0.0
    %1193 = vmatpush1.msra.mxu0 0.0
    %1194 = vmatprep.subr.mxu0 0.0
    %1195 = vmatpush1.msra.mxu0 0.0
    %1196 = vmatprep.mubr.f32.mxu0 0.0
    %v1197 = vand.u32 %v972, 4294901760
    %v1198 = vsub.f32 %v972, %v1197
    %1199 = vmatmul.mubr.f32.gmra.mrb[0].mxu0 %v1198
    %v1200 = vpop.f32.mrb[0].mxu0
    %v1201 = vadd.f32 %v1127, %v1200
    %v1202 = vpop.f32.mrb[0].mxu0
    %1203 = vdwg.mxu0
    %1204 = vmatprep.subr.mxu0 0.0
    %v1205 = vand.u32 %v976, 4294901760
    %1206 = vmatpush1.msra.mxu0 %v1205
    %1207 = vmatprep.subr.mxu0 0.0
    %1208 = vmatpush1.msra.mxu0 0.0
    %1209 = vmatprep.subr.mxu0 0.0
    %1210 = vmatpush1.msra.mxu0 0.0
    %1211 = vmatprep.subr.mxu0 0.0
    %1212 = vmatpush1.msra.mxu0 0.0
    %1213 = vmatprep.subr.mxu0 0.0
    %1214 = vmatpush1.msra.mxu0 0.0
    %1215 = vmatprep.subr.mxu0 0.0
    %1216 = vmatpush1.msra.mxu0 0.0
    %1217 = vmatprep.subr.mxu0 0.0
    %1218 = vmatpush1.msra.mxu0 0.0
    %1219 = vmatprep.subr.mxu0 0.0
    %1220 = vmatpush1.msra.mxu0 0.0
    %1221 = vmatprep.subr.mxu0 0.0
    %1222 = vmatpush1.msra.mxu0 0.0
    %1223 = vmatprep.subr.mxu0 0.0
    %1224 = vmatpush1.msra.mxu0 0.0
    %1225 = vmatprep.subr.mxu0 0.0
    %1226 = vmatpush1.msra.mxu0 0.0
    %1227 = vmatprep.subr.mxu0 0.0
    %1228 = vmatpush1.msra.mxu0 0.0
    %1229 = vmatprep.subr.mxu0 0.0
    %1230 = vmatpush1.msra.mxu0 0.0
    %1231 = vmatprep.subr.mxu0 0.0
    %1232 = vmatpush1.msra.mxu0 0.0
    %1233 = vmatprep.subr.mxu0 0.0
    %1234 = vmatpush1.msra.mxu0 0.0
    %1235 = vmatprep.subr.mxu0 0.0
    %1236 = vmatpush1.msra.mxu0 0.0
    %1237 = vmatprep.subr.mxu0 0.0
    %1238 = vmatpush1.msra.mxu0 0.0
    %1239 = vmatprep.subr.mxu0 0.0
    %1240 = vmatpush1.msra.mxu0 0.0
    %1241 = vmatprep.subr.mxu0 0.0
    %1242 = vmatpush1.msra.mxu0 0.0
    %1243 = vmatprep.subr.mxu0 0.0
    %1244 = vmatpush1.msra.mxu0 0.0
    %1245 = vmatprep.subr.mxu0 0.0
    %1246 = vmatpush1.msra.mxu0 0.0
    %1247 = vmatprep.subr.mxu0 0.0
    %1248 = vmatpush1.msra.mxu0 0.0
    %1249 = vmatprep.subr.mxu0 0.0
    %1250 = vmatpush1.msra.mxu0 0.0
    %1251 = vmatprep.subr.mxu0 0.0
    %1252 = vmatpush1.msra.mxu0 0.0
    %1253 = vmatprep.subr.mxu0 0.0
    %1254 = vmatpush1.msra.mxu0 0.0
    %1255 = vmatprep.subr.mxu0 0.0
    %1256 = vmatpush1.msra.mxu0 0.0
    %1257 = vmatprep.subr.mxu0 0.0
    %1258 = vmatpush1.msra.mxu0 0.0
    %1259 = vmatprep.subr.mxu0 0.0
    %1260 = vmatpush1.msra.mxu0 0.0
    %1261 = vmatprep.subr.mxu0 0.0
    %1262 = vmatpush1.msra.mxu0 0.0
    %1263 = vmatprep.subr.mxu0 0.0
    %1264 = vmatpush1.msra.mxu0 0.0
    %1265 = vmatprep.subr.mxu0 0.0
    %1266 = vmatpush1.msra.mxu0 0.0
    %1267 = vmatprep.subr.mxu0 0.0
    %1268 = vmatpush1.msra.mxu0 0.0
    %1269 = vmatprep.mubr.f32.mxu0 0.0
    %v1270 = vand.u32 %v972, 4294901760
    %v1271 = vsub.f32 %v972, %v1270
    %v1272 = vand.u32 %v1271, 4294901760
    %1273 = vmatmul.mubr.f32.gmra.mrb[0].mxu0 %v1272
    %v1274 = vpop.f32.mrb[0].mxu0
    %v1275 = vadd.f32 %v1201, %v1274
    %v1276 = vpop.f32.mrb[0].mxu0
    %1277 = vdwg.mxu0
    %1278 = vmatprep.subr.mxu0 0.0
    %v1279 = vand.u32 %v976, 4294901760
    %v1280 = vsub.f32 %v976, %v1279
    %v1281 = vand.u32 %v1280, 4294901760
    %1282 = vmatpush1.msra.mxu0 %v1281
    %1283 = vmatprep.subr.mxu0 0.0
    %1284 = vmatpush1.msra.mxu0 0.0
    %1285 = vmatprep.subr.mxu0 0.0
    %1286 = vmatpush1.msra.mxu0 0.0
    %1287 = vmatprep.subr.mxu0 0.0
    %1288 = vmatpush1.msra.mxu0 0.0
    %1289 = vmatprep.subr.mxu0 0.0
    %1290 = vmatpush1.msra.mxu0 0.0
    %1291 = vmatprep.subr.mxu0 0.0
    %1292 = vmatpush1.msra.mxu0 0.0
    %1293 = vmatprep.subr.mxu0 0.0
    %1294 = vmatpush1.msra.mxu0 0.0
    %1295 = vmatprep.subr.mxu0 0.0
    %1296 = vmatpush1.msra.mxu0 0.0
    %1297 = vmatprep.subr.mxu0 0.0
    %1298 = vmatpush1.msra.mxu0 0.0
    %1299 = vmatprep.subr.mxu0 0.0
    %1300 = vmatpush1.msra.mxu0 0.0
    %1301 = vmatprep.subr.mxu0 0.0
    %1302 = vmatpush1.msra.mxu0 0.0
    %1303 = vmatprep.subr.mxu0 0.0
    %1304 = vmatpush1.msra.mxu0 0.0
    %1305 = vmatprep.subr.mxu0 0.0
    %1306 = vmatpush1.msra.mxu0 0.0
    %1307 = vmatprep.subr.mxu0 0.0
    %1308 = vmatpush1.msra.mxu0 0.0
    %1309 = vmatprep.subr.mxu0 0.0
    %1310 = vmatpush1.msra.mxu0 0.0
    %1311 = vmatprep.subr.mxu0 0.0
    %1312 = vmatpush1.msra.mxu0 0.0
    %1313 = vmatprep.subr.mxu0 0.0
    %1314 = vmatpush1.msra.mxu0 0.0
    %1315 = vmatprep.subr.mxu0 0.0
    %1316 = vmatpush1.msra.mxu0 0.0
    %1317 = vmatprep.subr.mxu0 0.0
    %1318 = vmatpush1.msra.mxu0 0.0
    %1319 = vmatprep.subr.mxu0 0.0
    %1320 = vmatpush1.msra.mxu0 0.0
    %1321 = vmatprep.subr.mxu0 0.0
    %1322 = vmatpush1.msra.mxu0 0.0
    %1323 = vmatprep.subr.mxu0 0.0
    %1324 = vmatpush1.msra.mxu0 0.0
    %1325 = vmatprep.subr.mxu0 0.0
    %1326 = vmatpush1.msra.mxu0 0.0
    %1327 = vmatprep.subr.mxu0 0.0
    %1328 = vmatpush1.msra.mxu0 0.0
    %1329 = vmatprep.subr.mxu0 0.0
    %1330 = vmatpush1.msra.mxu0 0.0
    %1331 = vmatprep.subr.mxu0 0.0
    %1332 = vmatpush1.msra.mxu0 0.0
    %1333 = vmatprep.subr.mxu0 0.0
    %1334 = vmatpush1.msra.mxu0 0.0
    %1335 = vmatprep.subr.mxu0 0.0
    %1336 = vmatpush1.msra.mxu0 0.0
    %1337 = vmatprep.subr.mxu0 0.0
    %1338 = vmatpush1.msra.mxu0 0.0
    %1339 = vmatprep.subr.mxu0 0.0
    %1340 = vmatpush1.msra.mxu0 0.0
    %1341 = vmatprep.subr.mxu0 0.0
    %1342 = vmatpush1.msra.mxu0 0.0
    %1343 = vmatprep.subr.mxu0 0.0
    %1344 = vmatpush1.msra.mxu0 0.0
    %1345 = vmatprep.mubr.f32.mxu0 0.0
    %v1346 = vand.u32 %v972, 4294901760
    %1347 = vmatmul.mubr.f32.gmra.mrb[0].mxu0 %v1346
    %v1348 = vpop.f32.mrb[0].mxu0
    %v1349 = vadd.f32 %v1275, %v1348
    %v1350 = vpop.f32.mrb[0].mxu0
    %1351 = vdwg.mxu0
    %1352 = vmatprep.subr.mxu0 0.0
    %v1353 = vand.u32 %v976, 4294901760
    %1354 = vmatpush1.msra.mxu0 %v1353
    %1355 = vmatprep.subr.mxu0 0.0
    %1356 = vmatpush1.msra.mxu0 0.0
    %1357 = vmatprep.subr.mxu0 0.0
    %1358 = vmatpush1.msra.mxu0 0.0
    %1359 = vmatprep.subr.mxu0 0.0
    %1360 = vmatpush1.msra.mxu0 0.0
    %1361 = vmatprep.subr.mxu0 0.0
    %1362 = vmatpush1.msra.mxu0 0.0
    %1363 = vmatprep.subr.mxu0 0.0
    %1364 = vmatpush1.msra.mxu0 0.0
    %1365 = vmatprep.subr.mxu0 0.0
    %1366 = vmatpush1.msra.mxu0 0.0
    %1367 = vmatprep.subr.mxu0 0.0
    %1368 = vmatpush1.msra.mxu0 0.0
    %1369 = vmatprep.subr.mxu0 0.0
    %1370 = vmatpush1.msra.mxu0 0.0
    %1371 = vmatprep.subr.mxu0 0.0
    %1372 = vmatpush1.msra.mxu0 0.0
    %1373 = vmatprep.subr.mxu0 0.0
    %1374 = vmatpush1.msra.mxu0 0.0
    %1375 = vmatprep.subr.mxu0 0.0
    %1376 = vmatpush1.msra.mxu0 0.0
    %1377 = vmatprep.subr.mxu0 0.0
    %1378 = vmatpush1.msra.mxu0 0.0
    %1379 = vmatprep.subr.mxu0 0.0
    %1380 = vmatpush1.msra.mxu0 0.0
    %1381 = vmatprep.subr.mxu0 0.0
    %1382 = vmatpush1.msra.mxu0 0.0
    %1383 = vmatprep.subr.mxu0 0.0
    %1384 = vmatpush1.msra.mxu0 0.0
    %1385 = vmatprep.subr.mxu0 0.0
    %1386 = vmatpush1.msra.mxu0 0.0
    %1387 = vmatprep.subr.mxu0 0.0
    %1388 = vmatpush1.msra.mxu0 0.0
    %1389 = vmatprep.subr.mxu0 0.0
    %1390 = vmatpush1.msra.mxu0 0.0
    %1391 = vmatprep.subr.mxu0 0.0
    %1392 = vmatpush1.msra.mxu0 0.0
    %1393 = vmatprep.subr.mxu0 0.0
    %1394 = vmatpush1.msra.mxu0 0.0
    %1395 = vmatprep.subr.mxu0 0.0
    %1396 = vmatpush1.msra.mxu0 0.0
    %1397 = vmatprep.subr.mxu0 0.0
    %1398 = vmatpush1.msra.mxu0 0.0
    %1399 = vmatprep.subr.mxu0 0.0
    %1400 = vmatpush1.msra.mxu0 0.0
    %1401 = vmatprep.subr.mxu0 0.0
    %1402 = vmatpush1.msra.mxu0 0.0
    %1403 = vmatprep.subr.mxu0 0.0
    %1404 = vmatpush1.msra.mxu0 0.0
    %1405 = vmatprep.subr.mxu0 0.0
    %1406 = vmatpush1.msra.mxu0 0.0
    %1407 = vmatprep.subr.mxu0 0.0
    %1408 = vmatpush1.msra.mxu0 0.0
    %1409 = vmatprep.subr.mxu0 0.0
    %1410 = vmatpush1.msra.mxu0 0.0
    %1411 = vmatprep.subr.mxu0 0.0
    %1412 = vmatpush1.msra.mxu0 0.0
    %1413 = vmatprep.subr.mxu0 0.0
    %1414 = vmatpush1.msra.mxu0 0.0
    %1415 = vmatprep.subr.mxu0 0.0
    %1416 = vmatpush1.msra.mxu0 0.0
    %1417 = vmatprep.mubr.f32.mxu0 0.0
    %v1418 = vand.u32 %v972, 4294901760
    %1419 = vmatmul.mubr.f32.gmra.mrb[0].mxu0 %v1418
    %v1420 = vpop.f32.mrb[0].mxu0
    %v1421 = vadd.f32 %v1349, %v1420
    %v1422 = vpop.f32.mrb[0].mxu0
    %1423 = vdwg.mxu0
    %vm1424 = vcmask 25600
    %1425 = vst.msk [vmem:[#allocation5] sm:$0x3] %vm1424, %v1421
    // Predicated region
    $region30: #{tpu_custom_call.1} parent=1 // pred_check
      _
    $region31: #{tpu_custom_call.1} parent=1 // pred_check_branch
      %1427 = sbr.rel (0) target = $region33
    $region32: #{tpu_custom_call.1} parent=1 // pred_region
      %s1429 = ssub.s32 32, 32
      %1430 = vsyncadd [#allocation4], %s1429
      %s1432 = sshll.u32 [#allocation5], 4
      %s1433 = int_to_ptr.vmem [resolvable:$true] %s1432
      %1435 = dma.vmem_to_hbm [thread:$0]  %s1433, 32, %s6, [#allocation4]
    $region33: #{tpu_custom_call.1} parent=1 // pred_fallthru
      _
    // Predicated region
    $region34: #{tpu_custom_call.1} parent=1 // pred_check
      _
    $region35: #{tpu_custom_call.1} parent=1 // pred_check_branch
      %1437 = sbr.rel (0) target = $region37
    $region36: #{tpu_custom_call.1} parent=1 // pred_region
      %1438 = dma.done [#allocation4], 32
    $region37: #{tpu_custom_call.1} parent=1 // pred_fallthru
      _
    %1439 = vsyncpa [#allocation3], 1
    %1440 = vsyncpa [#allocation4], 1

</llo_original>
